<compile_context>
chip_gen: v7x
topology: tpu7x:2x2x1
jax: 0.10.0
libtpu: 0.0.40
codegen_flags: <defaults>
</compile_context>

<pallas_src>
import functools

import jax
import jax.numpy as jnp
from jax import lax
from jax.experimental import pallas as pl
from jax.experimental.pallas import tpu as pltpu


def _round_up(n, m):
    return ((n + m - 1) // m) * m


def residual_unit_kernel(x_ref, h_ref, a1_ref, w1_ref, b1_ref, a2_ref, w2_ref,
                         b2_ref, o_ref, *, kernel_size, dilation, pad, t_out,
                         per_tap, matmul_dtype):
    xm = x_ref[0]                                  # (C, tT) f32 main tile (= residual)

    a1 = a1_ref[...]                               # (C, 1)
    inv_a1 = 1.0 / (a1 + 1e-9)                     # exact; tiny (C,1) vector

    # Build the haloed window [left_halo | xm | right_halo] once in VMEM.
    if pad > 0:
        h = h_ref[0, 0]                            # (C, 2*pad): [:, :pad]=left, [:, pad:]=right
        win = jnp.concatenate([h[:, :pad], xm, h[:, pad:]], axis=1)
    else:
        win = xm                                   # (C, tT + 2*pad)

    # Snake1d #1: x + 1/(alpha+1e-9) * sin(alpha*x)^2   (snake(0) == 0, so the
    # zero time-padding at sequence edges stays exact through the conv).
    s1 = jnp.sin(a1 * win)
    y1 = (win + inv_a1 * (s1 * s1)).astype(matmul_dtype)

    # Dilated WNConv1d on the MXU.
    if per_tap:
        # K accumulating matmuls against shifted slices (no stacked operand).
        acc = jnp.dot(w1_ref[0], y1[:, :t_out],
                      preferred_element_type=jnp.float32)
        for k in range(1, kernel_size):
            acc = acc + jnp.dot(w1_ref[k],
                                y1[:, k * dilation:k * dilation + t_out],
                                preferred_element_type=jnp.float32)
    else:
        # Small Cin: fuse the K taps into one deep-contraction matmul.
        stacked = jnp.concatenate(
            [y1[:, k * dilation:k * dilation + t_out] for k in range(kernel_size)],
            axis=0)                                # (K*Cin, tT)
        acc = jnp.dot(w1_ref[...], stacked, preferred_element_type=jnp.float32)
    acc = acc + b1_ref[...]                        # bias once, after the matmul(s)

    # Snake1d #2
    a2 = a2_ref[...]
    inv_a2 = 1.0 / (a2 + 1e-9)
    s2 = jnp.sin(a2 * acc)
    y2 = (acc + inv_a2 * (s2 * s2)).astype(matmul_dtype)

    # 1x1 WNConv1d == plain channel matmul.
    y3 = jnp.dot(w2_ref[...], y2, preferred_element_type=jnp.float32) + b2_ref[...]

    # Residual connection uses the already-resident main tile.
    o_ref[0] = (xm + y3).astype(o_ref.dtype)


def residual_unit(x, params, *, kernel_size=7, dilation=1, time_tile=None,
                  matmul_dtype=jnp.bfloat16, taps_fused=None):
    """x: (B, C, T) float32.

    params (PyTorch-shaped, weight_norm already folded):
      alpha1 (1,C,1), w1 (C,C,K), b1 (C,), alpha2 (1,C,1), w2 (C,C,1), b2 (C,)
    """
    B, C, T = x.shape
    alpha1, w1, b1, alpha2, w2, b2 = params
    K = kernel_size
    assert ((K - 1) * dilation) % 2 == 0, "conv must be length-preserving"
    pad = (K - 1) * dilation // 2

    # Lane-dense time tile (multiple of 128).  With bf16 weights + the per-tap
    # path the C<=512 working set at tT=1024 fits comfortably; shrink for very
    # wide channels (v7x has 64 MiB physical VMEM).
    if time_tile is None:
        time_tile = 1024 if C <= 512 else 512
    tT = min(_round_up(time_tile, 128), _round_up(T, 128))
    T_round = _round_up(T, tT)
    nT = T_round // tT
    assert pad < tT

    # Tap strategy: for Cin >= 128 accumulate K matmuls (full-ish MXU depth,
    # no 7x-replicated stacked operand); for small Cin fuse taps into one
    # deep-contraction matmul.
    if taps_fused is None:
        taps_fused = C < 128
    per_tap = (not taps_fused) and K > 1

    # Parameter reshapes / casts (wrapper-side glue; weight_norm pre-folded).
    a1 = alpha1.reshape(C, 1).astype(jnp.float32)
    a2 = alpha2.reshape(C, 1).astype(jnp.float32)
    b1c = b1.reshape(C, 1).astype(jnp.float32)
    b2c = b2.reshape(C, 1).astype(jnp.float32)
    if per_tap:
        w1m = jnp.transpose(w1, (2, 0, 1)).astype(matmul_dtype)          # (K, Cout, Cin)
        w1_spec = pl.BlockSpec((K, C, C), lambda b, t: (0, 0, 0))
    else:
        w1m = jnp.transpose(w1, (0, 2, 1)).reshape(C, K * C).astype(matmul_dtype)
        w1_spec = pl.BlockSpec((C, K * C), lambda b, t: (0, 0))
    w2m = w2.reshape(C, C).astype(matmul_dtype)

    # Main activation tiles (single stream, also the residual), zero-padded to
    # a multiple of tT.
    xm = jnp.pad(x, ((0, 0), (0, 0), (0, T_round - T)))

    # Halo sidecar: only the 2*pad edge columns each tile needs from its
    # neighbours (zeros at sequence edges == the conv's zero padding).
    if pad > 0:
        tiles = xm.reshape(B, C, nT, tT)
        zcol = jnp.zeros((B, C, 1, pad), x.dtype)
        left = jnp.concatenate([zcol, tiles[:, :, :-1, tT - pad:]], axis=2)
        right = jnp.concatenate([tiles[:, :, 1:, :pad], zcol], axis=2)
        halos = jnp.transpose(jnp.concatenate([left, right], axis=-1),
                              (0, 2, 1, 3))                               # (B,nT,C,2*pad)
        hW = 2 * pad
    else:
        halos = jnp.zeros((B, nT, C, 1), x.dtype)
        hW = 1

    kern = functools.partial(
        residual_unit_kernel, kernel_size=K, dilation=dilation, pad=pad,
        t_out=tT, per_tap=per_tap, matmul_dtype=matmul_dtype)

    # Explicit VMEM limit (default scoped limit of 16/32 MiB is too small for
    # wide-channel configs); clamp to the chip's capacity when queryable.
    mm = jnp.dtype(matmul_dtype).itemsize
    est = (4 * C * tT * 4                              # x + out tiles, double-buffered
           + 2 * C * hW * 4                            # halo sidecar
           + 2 * (K * C * C + C * C) * mm              # w1 + w2, double-buffered
           + 2 * C * (tT + 2 * pad) * 4                # window + snaked window
           + (K if not per_tap else 2) * C * tT * mm   # stacked operand / tap slices
           + 3 * C * tT * 4)                           # acc / y2 / y3
    try:
        cap = int(pltpu.get_tpu_info().vmem_capacity_bytes)
    except Exception:  # fall back to the smallest current generation (v7x: 64 MiB)
        cap = 64 << 20
    vmem_limit = int(min(max(int(est * 1.5), 32 << 20), cap - (2 << 20)))

    out = pl.pallas_call(
        kern,
        out_shape=jax.ShapeDtypeStruct((B, C, T_round), x.dtype),
        grid_spec=pltpu.PrefetchScalarGridSpec(
            num_scalar_prefetch=0,
            grid=(B, nT),
            in_specs=[
                pl.BlockSpec((1, C, tT), lambda b, t: (b, 0, t)),        # x main tile
                pl.BlockSpec((1, 1, C, hW), lambda b, t: (b, t, 0, 0)),  # halo columns
                pl.BlockSpec((C, 1), lambda b, t: (0, 0)),               # alpha1
                w1_spec,                                                 # conv weight
                pl.BlockSpec((C, 1), lambda b, t: (0, 0)),               # b1
                pl.BlockSpec((C, 1), lambda b, t: (0, 0)),               # alpha2
                pl.BlockSpec((C, C), lambda b, t: (0, 0)),               # w2 (1x1)
                pl.BlockSpec((C, 1), lambda b, t: (0, 0)),               # b2
            ],
            out_specs=pl.BlockSpec((1, C, tT), lambda b, t: (b, 0, t)),
        ),
        compiler_params=pltpu.CompilerParams(
            dimension_semantics=("parallel", "parallel"),
            vmem_limit_bytes=vmem_limit),
    )(xm, halos, a1, w1m, b1c, a2, w2m, b2c)

    return out[:, :, :T]


def make_params(key, dim, kernel_size):
    """Deterministic synthetic params; weight_norm folded: w = g * v / ||v||."""
    ks = jax.random.split(key, 6)
    v1 = jax.random.normal(ks[0], (dim, dim, kernel_size), jnp.float32) * 0.1
    g1 = 1.0 + 0.1 * jax.random.normal(ks[1], (dim, 1, 1), jnp.float32)
    b1 = 0.1 * jax.random.normal(ks[2], (dim,), jnp.float32)
    v2 = jax.random.normal(ks[3], (dim, dim, 1), jnp.float32) * 0.1
    g2 = 1.0 + 0.1 * jax.random.normal(ks[4], (dim, 1, 1), jnp.float32)
    b2 = 0.1 * jax.random.normal(ks[5], (dim,), jnp.float32)

    def weight_norm(v, g):
        norm = jnp.sqrt(jnp.sum(v * v, axis=(1, 2), keepdims=True))
        return g * v / norm

    w1 = weight_norm(v1, g1)                       # (dim, dim, K)
    w2 = weight_norm(v2, g2)                       # (dim, dim, 1)
    alpha1 = jnp.ones((1, dim, 1), jnp.float32)    # Snake1d init: ones
    alpha2 = jnp.ones((1, dim, 1), jnp.float32)
    return (alpha1, w1, b1, alpha2, w2, b2)


def residual_unit_ref(x, params, *, kernel_size=7, dilation=1):
    """Pure-JAX reference mirroring the PyTorch forward."""
    alpha1, w1, b1, alpha2, w2, b2 = params
    pad = (kernel_size - 1) * dilation // 2

    def snake(x, a):
        return x + (1.0 / (a + 1e-9)) * jnp.sin(a * x) ** 2

    y = snake(x, alpha1)
    y = lax.conv_general_dilated(
        y, w1, window_strides=(1,), padding=[(pad, pad)],
        rhs_dilation=(dilation,), dimension_numbers=('NCH', 'OIH', 'NCH'))
    y = y + b1.reshape(1, -1, 1)
    y = snake(y, alpha2)
    y = lax.conv_general_dilated(
        y, w2, window_strides=(1,), padding=[(0, 0)],
        dimension_numbers=('NCH', 'OIH', 'NCH'))
    y = y + b2.reshape(1, -1, 1)
    return x + y


if __name__ == "__main__":
    B, DIM, T = 2, 16, 200
    KERNEL_SIZE, DILATION = 7, 1

    key = jax.random.PRNGKey(0)
    kx, kp = jax.random.split(key)
    x = jax.random.normal(kx, (B, DIM, T), jnp.float32)
    params = make_params(kp, DIM, KERNEL_SIZE)
    ref = residual_unit_ref(x, params, kernel_size=KERNEL_SIZE, dilation=DILATION)

    # time_tile=128 forces multiple time tiles (exercises the halo sidecar).
    # 1) f32 MXU path, fused-tap (small-C) variant: tight check.
    run_f32 = jax.jit(functools.partial(
        residual_unit, kernel_size=KERNEL_SIZE, dilation=DILATION,
        time_tile=128, matmul_dtype=jnp.float32))
    out = jax.block_until_ready(run_f32(x, params))
    assert out.shape == (B, DIM, T)
    assert jnp.max(jnp.abs(out - ref)) < 1e-3, "f32 fused-tap mismatch vs reference"

    # 2) f32, per-tap accumulation path (the path wide-channel configs use).
    run_pt = jax.jit(functools.partial(
        residual_unit, kernel_size=KERNEL_SIZE, dilation=DILATION,
        time_tile=128, matmul_dtype=jnp.float32, taps_fused=False))
    out_pt = jax.block_until_ready(run_pt(x, params))
    assert jnp.max(jnp.abs(out_pt - ref)) < 1e-3, "f32 per-tap mismatch vs reference"

    # 3) default bf16 MXU path (f32 accumulation): looser tolerance.
    run_bf16 = jax.jit(functools.partial(
        residual_unit, kernel_size=KERNEL_SIZE, dilation=DILATION, time_tile=128))
    out_bf = jax.block_until_ready(run_bf16(x, params))
    assert jnp.max(jnp.abs(out_bf - ref)) < 1e-1, "bf16 path mismatch vs reference"

    print("KERNEL_OK")
</pallas_src>

<mosaic_0001>
module attributes {stable_mosaic.version = 11 : i64} {
  func.func @residual_unit_kernel(%arg0: i32, %arg1: i32, %arg2: memref<1x16x128xf32, #tpu.memory_space<vmem>>, %arg3: memref<1x1x16x6xf32, #tpu.memory_space<vmem>>, %arg4: memref<16x1xf32, #tpu.memory_space<vmem>>, %arg5: memref<16x112xf32, #tpu.memory_space<vmem>>, %arg6: memref<16x1xf32, #tpu.memory_space<vmem>>, %arg7: memref<16x1xf32, #tpu.memory_space<vmem>>, %arg8: memref<16x16xf32, #tpu.memory_space<vmem>>, %arg9: memref<16x1xf32, #tpu.memory_space<vmem>>, %arg10: memref<1x16x128xf32, #tpu.memory_space<vmem>>) attributes {dimension_semantics = [#tpu.dimension_semantics<parallel>, #tpu.dimension_semantics<parallel>], iteration_bounds = array<i64: 2, 2>, scalar_prefetch = 0 : i64, scratch_operands = 0 : i64, tpu.core_type = #tpu.core_type<tc>, window_params = [{transform_indices = @transform_0, window_bounds = array<i64: 1, 16, 128>}, {transform_indices = @transform_1, window_bounds = array<i64: 1, 1, 16, 6>}, {pipeline_mode = #tpu.pipeline_mode<synchronous>, transform_indices = @transform_2, window_bounds = array<i64: 16, 1>}, {pipeline_mode = #tpu.pipeline_mode<synchronous>, transform_indices = @transform_3, window_bounds = array<i64: 16, 112>}, {pipeline_mode = #tpu.pipeline_mode<synchronous>, transform_indices = @transform_4, window_bounds = array<i64: 16, 1>}, {pipeline_mode = #tpu.pipeline_mode<synchronous>, transform_indices = @transform_5, window_bounds = array<i64: 16, 1>}, {pipeline_mode = #tpu.pipeline_mode<synchronous>, transform_indices = @transform_6, window_bounds = array<i64: 16, 16>}, {pipeline_mode = #tpu.pipeline_mode<synchronous>, transform_indices = @transform_7, window_bounds = array<i64: 16, 1>}, {transform_indices = @transform_8, window_bounds = array<i64: 1, 16, 128>}]} {
    %c0 = arith.constant 0 : index
    %c0_0 = arith.constant 0 : index
    %c0_1 = arith.constant 0 : index
    %0 = vector.load %arg2[%c0, %c0_0, %c0_1] : memref<1x16x128xf32, #tpu.memory_space<vmem>>, vector<1x16x128xf32>
    %1 = vector.shape_cast %0 : vector<1x16x128xf32> to vector<16x128xf32>
    %c0_2 = arith.constant 0 : index
    %c0_3 = arith.constant 0 : index
    %2 = vector.load %arg4[%c0_2, %c0_3] : memref<16x1xf32, #tpu.memory_space<vmem>>, vector<16x1xf32>
    %cst = arith.constant 9.99999971E-10 : f32
    %3 = vector.broadcast %cst : f32 to vector<16x1xf32>
    %4 = arith.addf %2, %3 : vector<16x1xf32>
    %cst_4 = arith.constant 1.000000e+00 : f32
    %5 = vector.broadcast %cst_4 : f32 to vector<16x1xf32>
    %6 = arith.divf %5, %4 : vector<16x1xf32>
    %c0_5 = arith.constant 0 : index
    %c0_6 = arith.constant 0 : index
    %c0_7 = arith.constant 0 : index
    %c0_8 = arith.constant 0 : index
    %7 = vector.load %arg3[%c0_5, %c0_6, %c0_7, %c0_8] : memref<1x1x16x6xf32, #tpu.memory_space<vmem>>, vector<1x1x16x6xf32>
    %8 = vector.shape_cast %7 : vector<1x1x16x6xf32> to vector<16x6xf32>
    %9 = vector.extract_strided_slice %8 {offsets = [0, 0], sizes = [16, 3], strides = [1, 1]} : vector<16x6xf32> to vector<16x3xf32>
    %10 = vector.extract_strided_slice %8 {offsets = [0, 3], sizes = [16, 3], strides = [1, 1]} : vector<16x6xf32> to vector<16x3xf32>
    %11 = tpu.concatenate %9, %1, %10 in 1 : vector<16x3xf32>, vector<16x128xf32>, vector<16x3xf32> -> vector<16x134xf32>
    %12 = vector.broadcast %2 : vector<16x1xf32> to vector<16x134xf32>
    %13 = arith.mulf %12, %11 : vector<16x134xf32>
    %14 = math.sin %13 : vector<16x134xf32>
    %15 = arith.mulf %14, %14 : vector<16x134xf32>
    %16 = vector.broadcast %6 : vector<16x1xf32> to vector<16x134xf32>
    %17 = arith.mulf %16, %15 : vector<16x134xf32>
    %18 = arith.addf %11, %17 : vector<16x134xf32>
    %19 = vector.extract_strided_slice %18 {offsets = [0, 0], sizes = [16, 128], strides = [1, 1]} : vector<16x134xf32> to vector<16x128xf32>
    %20 = vector.extract_strided_slice %18 {offsets = [0, 1], sizes = [16, 128], strides = [1, 1]} : vector<16x134xf32> to vector<16x128xf32>
    %21 = vector.extract_strided_slice %18 {offsets = [0, 2], sizes = [16, 128], strides = [1, 1]} : vector<16x134xf32> to vector<16x128xf32>
    %22 = vector.extract_strided_slice %18 {offsets = [0, 3], sizes = [16, 128], strides = [1, 1]} : vector<16x134xf32> to vector<16x128xf32>
    %23 = vector.extract_strided_slice %18 {offsets = [0, 4], sizes = [16, 128], strides = [1, 1]} : vector<16x134xf32> to vector<16x128xf32>
    %24 = vector.extract_strided_slice %18 {offsets = [0, 5], sizes = [16, 128], strides = [1, 1]} : vector<16x134xf32> to vector<16x128xf32>
    %25 = vector.extract_strided_slice %18 {offsets = [0, 6], sizes = [16, 128], strides = [1, 1]} : vector<16x134xf32> to vector<16x128xf32>
    %26 = tpu.concatenate %19, %20, %21, %22, %23, %24, %25 in 0 : vector<16x128xf32>, vector<16x128xf32>, vector<16x128xf32>, vector<16x128xf32>, vector<16x128xf32>, vector<16x128xf32>, vector<16x128xf32> -> vector<112x128xf32>
    %c0_9 = arith.constant 0 : index
    %c0_10 = arith.constant 0 : index
    %27 = vector.load %arg5[%c0_9, %c0_10] : memref<16x112xf32, #tpu.memory_space<vmem>>, vector<16x112xf32>
    %cst_11 = arith.constant dense<0.000000e+00> : vector<16x128xf32>
    %28 = tpu.matmul %27, %26, %cst_11 {dimension_numbers = #tpu.dot_dimension_numbers<[1], [0], [0], [1], [0, 0, 1, 1], [], []>} : vector<16x112xf32>, vector<112x128xf32>, vector<16x128xf32> -> vector<16x128xf32>
    %c0_12 = arith.constant 0 : index
    %c0_13 = arith.constant 0 : index
    %29 = vector.load %arg6[%c0_12, %c0_13] : memref<16x1xf32, #tpu.memory_space<vmem>>, vector<16x1xf32>
    %30 = vector.broadcast %29 : vector<16x1xf32> to vector<16x128xf32>
    %31 = arith.addf %28, %30 : vector<16x128xf32>
    %c0_14 = arith.constant 0 : index
    %c0_15 = arith.constant 0 : index
    %32 = vector.load %arg7[%c0_14, %c0_15] : memref<16x1xf32, #tpu.memory_space<vmem>>, vector<16x1xf32>
    %cst_16 = arith.constant 9.99999971E-10 : f32
    %33 = vector.broadcast %cst_16 : f32 to vector<16x1xf32>
    %34 = arith.addf %32, %33 : vector<16x1xf32>
    %cst_17 = arith.constant 1.000000e+00 : f32
    %35 = vector.broadcast %cst_17 : f32 to vector<16x1xf32>
    %36 = arith.divf %35, %34 : vector<16x1xf32>
    %37 = vector.broadcast %32 : vector<16x1xf32> to vector<16x128xf32>
    %38 = arith.mulf %37, %31 : vector<16x128xf32>
    %39 = math.sin %38 : vector<16x128xf32>
    %40 = arith.mulf %39, %39 : vector<16x128xf32>
    %41 = vector.broadcast %36 : vector<16x1xf32> to vector<16x128xf32>
    %42 = arith.mulf %41, %40 : vector<16x128xf32>
    %43 = arith.addf %31, %42 : vector<16x128xf32>
    %c0_18 = arith.constant 0 : index
    %c0_19 = arith.constant 0 : index
    %44 = vector.load %arg8[%c0_18, %c0_19] : memref<16x16xf32, #tpu.memory_space<vmem>>, vector<16x16xf32>
    %cst_20 = arith.constant dense<0.000000e+00> : vector<16x128xf32>
    %45 = tpu.matmul %44, %43, %cst_20 {dimension_numbers = #tpu.dot_dimension_numbers<[1], [0], [0], [1], [0, 0, 1, 1], [], []>} : vector<16x16xf32>, vector<16x128xf32>, vector<16x128xf32> -> vector<16x128xf32>
    %c0_21 = arith.constant 0 : index
    %c0_22 = arith.constant 0 : index
    %46 = vector.load %arg9[%c0_21, %c0_22] : memref<16x1xf32, #tpu.memory_space<vmem>>, vector<16x1xf32>
    %47 = vector.broadcast %46 : vector<16x1xf32> to vector<16x128xf32>
    %48 = arith.addf %45, %47 : vector<16x128xf32>
    %49 = arith.addf %1, %48 : vector<16x128xf32>
    %c0_23 = arith.constant 0 : index
    %c0_24 = arith.constant 0 : index
    %c0_25 = arith.constant 0 : index
    %50 = vector.load %arg10[%c0_23, %c0_24, %c0_25] : memref<1x16x128xf32, #tpu.memory_space<vmem>>, vector<1x16x128xf32>
    %51 = vector.shape_cast %50 : vector<1x16x128xf32> to vector<16x128xf32>
    %52 = vector.shape_cast %49 : vector<16x128xf32> to vector<1x16x128xf32>
    tpu.vector_store %arg10[%c0_23, %c0_24, %c0_25], %52 {strides = array<i32>} : memref<1x16x128xf32, #tpu.memory_space<vmem>>, vector<1x16x128xf32>,
    return
  }
  func.func @transform_0(%arg0: i32, %arg1: i32) -> (i32, i32, i32) {
    %c0_i32 = arith.constant 0 : i32
    %c0_i32_0 = arith.constant 0 : i32
    return %arg0, %c0_i32, %arg1 : i32, i32, i32
  }
  func.func @transform_1(%arg0: i32, %arg1: i32) -> (i32, i32, i32, i32) {
    %c0_i32 = arith.constant 0 : i32
    %c0_i32_0 = arith.constant 0 : i32
    %c0_i32_1 = arith.constant 0 : i32
    return %arg0, %arg1, %c0_i32, %c0_i32_0 : i32, i32, i32, i32
  }
  func.func @transform_2(%arg0: i32, %arg1: i32) -> (i32, i32) {
    %c0_i32 = arith.constant 0 : i32
    %c0_i32_0 = arith.constant 0 : i32
    %c0_i32_1 = arith.constant 0 : i32
    return %c0_i32, %c0_i32_0 : i32, i32
  }
  func.func @transform_3(%arg0: i32, %arg1: i32) -> (i32, i32) {
    %c0_i32 = arith.constant 0 : i32
    %c0_i32_0 = arith.constant 0 : i32
    %c0_i32_1 = arith.constant 0 : i32
    return %c0_i32, %c0_i32_0 : i32, i32
  }
  func.func @transform_4(%arg0: i32, %arg1: i32) -> (i32, i32) {
    %c0_i32 = arith.constant 0 : i32
    %c0_i32_0 = arith.constant 0 : i32
    %c0_i32_1 = arith.constant 0 : i32
    return %c0_i32, %c0_i32_0 : i32, i32
  }
  func.func @transform_5(%arg0: i32, %arg1: i32) -> (i32, i32) {
    %c0_i32 = arith.constant 0 : i32
    %c0_i32_0 = arith.constant 0 : i32
    %c0_i32_1 = arith.constant 0 : i32
    return %c0_i32, %c0_i32_0 : i32, i32
  }
  func.func @transform_6(%arg0: i32, %arg1: i32) -> (i32, i32) {
    %c0_i32 = arith.constant 0 : i32
    %c0_i32_0 = arith.constant 0 : i32
    %c0_i32_1 = arith.constant 0 : i32
    return %c0_i32, %c0_i32_0 : i32, i32
  }
  func.func @transform_7(%arg0: i32, %arg1: i32) -> (i32, i32) {
    %c0_i32 = arith.constant 0 : i32
    %c0_i32_0 = arith.constant 0 : i32
    %c0_i32_1 = arith.constant 0 : i32
    return %c0_i32, %c0_i32_0 : i32, i32
  }
  func.func @transform_8(%arg0: i32, %arg1: i32) -> (i32, i32, i32) {
    %c0_i32 = arith.constant 0 : i32
    %c0_i32_0 = arith.constant 0 : i32
    return %arg0, %c0_i32, %arg1 : i32, i32, i32
  }
}

</mosaic_0001>

<llo_original>
// kernel: residual_unit.1
$region0: #{residual_unit.1}
  #allocation0 [shape = 'u32[]', space=smem, size = 0x4, offset = 0x4, fixed_abs, tag = 'smem constant byte address 0x4 - core index']
  #allocation1 [shape = 'u32[144,128]{1,0:T(1,128)}', space=vmem, size = 0x12000, scoped, tag = 'internal scratch']
  %s0 = inlined_call_operand.vmem [shape: f32[2,16,256], index: 0, kind: input, shape index: {}]
  %s1 = inlined_call_operand.vmem [shape: f32[2,2,16,6], index: 1, kind: input, shape index: {}]
  %s2 = inlined_call_operand.vmem [shape: f32[16,1], index: 2, kind: input, shape index: {}]
  %s3 = inlined_call_operand.vmem [shape: f32[16,112], index: 3, kind: input, shape index: {}]
  %s4 = inlined_call_operand.vmem [shape: f32[16,1], index: 4, kind: input, shape index: {}]
  %s5 = inlined_call_operand.vmem [shape: f32[16,1], index: 5, kind: input, shape index: {}]
  %s6 = inlined_call_operand.vmem [shape: f32[16,16], index: 6, kind: input, shape index: {}]
  %s7 = inlined_call_operand.vmem [shape: f32[16,1], index: 7, kind: input, shape index: {}]
  %s8 = inlined_call_operand.hbm [shape: f32[2,16,256], index: 8, kind: output, shape index: {}]
  %s9 = sld [smem:[#allocation0]]
  $region103: #{residual_unit.1} parent=0
    _
  %s11 = ssub.s32 1, %s9
  %s12 = scalar_select 0, %s11, %s9
  $region1: #{residual_unit.1} parent=0
    #allocation2 [shape = 'u8[16384]{0}', space=vmem, size = 0x4000, scoped, tag = 'input window, operand 0']
    #allocation3 [shape = 'u8[16384]{0}', space=vmem, size = 0x4000, scoped, tag = 'output window, operand 0']
    #allocation4 [shape = 's32[2]{0}', space=sflag, size = 0x8, scoped, tag = 'scoped memory for residual_unit.1']
    %13 = vsyncpa [#allocation4], 0
    %s14 = scalar_lea.sflag [#allocation4], 1
    %15 = vsyncpa %s14, 0
    loop: start=0, step=1, limit=6
    $region2: #{residual_unit.1} parent=1 // loop_pre_header
      _
    $region3: #{residual_unit.1} parent=1 // loop_header
      %s17 = sphi 0, %s21
      %p18 = scmp.ge.s32.totalorder %s17, 6
      %s24 = sphi 0, %s36
      %s25 = sphi 0, %s32
      %s26 = sphi 0, %s24
      %s27 = sphi 0, %s25
      %s28 = sphi 0, %s26
      %s29 = sphi 0, %s27
      %s41 = sphi 0, %s43
      %s44 = sphi 0, %s41
      %s45 = sphi 0, %s44
      %s61 = sphi 0, %s45
      %s69 = sphi 0, %s71
      %s72 = sphi 0, %s69
      %s73 = sphi 0, %s72
      %s89 = sphi 0, %s73
      %s93 = sphi 0, %s93
      %s95 = sphi 0, %s93
      %s96 = sphi 0, %s95
      %s110 = sphi 0, %s96
      %s114 = sphi 0, %s114
      %s116 = sphi 0, %s114
      %s117 = sphi 0, %s116
      %s131 = sphi 0, %s117
      %s135 = sphi 0, %s135
      %s137 = sphi 0, %s135
      %s138 = sphi 0, %s137
      %s152 = sphi 0, %s138
      %s156 = sphi 0, %s156
      %s158 = sphi 0, %s156
      %s159 = sphi 0, %s158
      %s173 = sphi 0, %s159
      %s177 = sphi 0, %s177
      %s179 = sphi 0, %s177
      %s180 = sphi 0, %s179
      %s194 = sphi 0, %s180
      %s198 = sphi 0, %s198
      %s200 = sphi 0, %s198
      %s201 = sphi 0, %s200
      %s215 = sphi 0, %s201
      %s223 = sphi 0, %s225
      %s226 = sphi 0, %s223
      %s227 = sphi 0, %s226
      %s243 = sphi 0, %s227
    $region4: #{residual_unit.1} parent=1 // loop_header_branch
      %20 = sbr.rel (%p18) target = $region8
    $region5: #{residual_unit.1} parent=1 // loop_body
      %s22 = ssub.s32 %s17, 1
      %s23 = ssub.s32 %s17, 2
      %s30 = sadd.s32 1, %s25
      %p31 = scmp.ge.s32.totalorder %s30, 2
      %s32 = scalar_select %p31, 0, %s30
      %s33 = sadd.s32 1, %s24
      %s34 = scalar_select %p31, %s33, %s24
      %p35 = scmp.ge.s32.totalorder %s34, 2
      %s36 = scalar_select %p35, 0, %s34
      %s37 = ssub.s32 %s24, %s36
      %s38 = ssub.s32 %s25, %s32
      %s39 = sor.u32 %s37, %s38
      %p40 = scmp.eq.s32.totalorder %s39, 0
      %s42 = sadd.s32 %s41, 1
      %s43 = scalar_select %p40, %s41, %s42
      %p46 = pneg %p40
      %p47 = scmp.eq.s32.totalorder %s17, 3
      %p48 = por %p46, %p47
      %p49 = scmp.ne.s32.totalorder %s41, %s44
      %p50 = scmp.eq.s32.totalorder %s17, 0
      %p51 = por %p49, %p50
      %p52 = scmp.ne.s32.totalorder %s41, %s44
      %p53 = scmp.eq.s32.totalorder %s22, 3
      %p54 = por %p52, %p53
      %p55 = scmp.ne.s32.totalorder %s44, %s45
      %p56 = scmp.eq.s32.totalorder %s22, 0
      %p57 = por %p55, %p56
      %p58 = scmp.ne.s32.totalorder %s44, %s45
      %p59 = scmp.eq.s32.totalorder %s23, 3
      %p60 = por %p58, %p59
      %p62 = scmp.ne.s32.totalorder %s45, %s61
      %p63 = scmp.eq.s32.totalorder %s23, 0
      %p64 = por %p62, %p63
      %s65 = ssub.s32 %s24, %s36
      %s66 = ssub.s32 %s25, %s32
      %s67 = sor.u32 %s65, %s66
      %p68 = scmp.eq.s32.totalorder %s67, 0
      %s70 = sadd.s32 %s69, 1
      %s71 = scalar_select %p68, %s69, %s70
      %p74 = pneg %p68
      %p75 = scmp.eq.s32.totalorder %s17, 3
      %p76 = por %p74, %p75
      %p77 = scmp.ne.s32.totalorder %s69, %s72
      %p78 = scmp.eq.s32.totalorder %s17, 0
      %p79 = por %p77, %p78
      %p80 = scmp.ne.s32.totalorder %s69, %s72
      %p81 = scmp.eq.s32.totalorder %s22, 3
      %p82 = por %p80, %p81
      %p83 = scmp.ne.s32.totalorder %s72, %s73
      %p84 = scmp.eq.s32.totalorder %s22, 0
      %p85 = por %p83, %p84
      %p86 = scmp.ne.s32.totalorder %s72, %s73
      %p87 = scmp.eq.s32.totalorder %s23, 3
      %p88 = por %p86, %p87
      %p90 = scmp.ne.s32.totalorder %s73, %s89
      %p91 = scmp.eq.s32.totalorder %s23, 0
      %p92 = por %p90, %p91
      %s94 = sadd.s32 %s93, 1
      %p97 = scmp.eq.s32.totalorder %s17, 3
      %p98 = scmp.ne.s32.totalorder %s93, %s95
      %p99 = scmp.eq.s32.totalorder %s17, 0
      %p100 = por %p98, %p99
      %p101 = scmp.ne.s32.totalorder %s93, %s95
      %p102 = scmp.eq.s32.totalorder %s22, 3
      %p103 = por %p101, %p102
      %p104 = scmp.ne.s32.totalorder %s95, %s96
      %p105 = scmp.eq.s32.totalorder %s22, 0
      %p106 = por %p104, %p105
      %p107 = scmp.ne.s32.totalorder %s95, %s96
      %p108 = scmp.eq.s32.totalorder %s23, 3
      %p109 = por %p107, %p108
      %p111 = scmp.ne.s32.totalorder %s96, %s110
      %p112 = scmp.eq.s32.totalorder %s23, 0
      %p113 = por %p111, %p112
      %s115 = sadd.s32 %s114, 1
      %p118 = scmp.eq.s32.totalorder %s17, 3
      %p119 = scmp.ne.s32.totalorder %s114, %s116
      %p120 = scmp.eq.s32.totalorder %s17, 0
      %p121 = por %p119, %p120
      %p122 = scmp.ne.s32.totalorder %s114, %s116
      %p123 = scmp.eq.s32.totalorder %s22, 3
      %p124 = por %p122, %p123
      %p125 = scmp.ne.s32.totalorder %s116, %s117
      %p126 = scmp.eq.s32.totalorder %s22, 0
      %p127 = por %p125, %p126
      %p128 = scmp.ne.s32.totalorder %s116, %s117
      %p129 = scmp.eq.s32.totalorder %s23, 3
      %p130 = por %p128, %p129
      %p132 = scmp.ne.s32.totalorder %s117, %s131
      %p133 = scmp.eq.s32.totalorder %s23, 0
      %p134 = por %p132, %p133
      %s136 = sadd.s32 %s135, 1
      %p139 = scmp.eq.s32.totalorder %s17, 3
      %p140 = scmp.ne.s32.totalorder %s135, %s137
      %p141 = scmp.eq.s32.totalorder %s17, 0
      %p142 = por %p140, %p141
      %p143 = scmp.ne.s32.totalorder %s135, %s137
      %p144 = scmp.eq.s32.totalorder %s22, 3
      %p145 = por %p143, %p144
      %p146 = scmp.ne.s32.totalorder %s137, %s138
      %p147 = scmp.eq.s32.totalorder %s22, 0
      %p148 = por %p146, %p147
      %p149 = scmp.ne.s32.totalorder %s137, %s138
      %p150 = scmp.eq.s32.totalorder %s23, 3
      %p151 = por %p149, %p150
      %p153 = scmp.ne.s32.totalorder %s138, %s152
      %p154 = scmp.eq.s32.totalorder %s23, 0
      %p155 = por %p153, %p154
      %s157 = sadd.s32 %s156, 1
      %p160 = scmp.eq.s32.totalorder %s17, 3
      %p161 = scmp.ne.s32.totalorder %s156, %s158
      %p162 = scmp.eq.s32.totalorder %s17, 0
      %p163 = por %p161, %p162
      %p164 = scmp.ne.s32.totalorder %s156, %s158
      %p165 = scmp.eq.s32.totalorder %s22, 3
      %p166 = por %p164, %p165
      %p167 = scmp.ne.s32.totalorder %s158, %s159
      %p168 = scmp.eq.s32.totalorder %s22, 0
      %p169 = por %p167, %p168
      %p170 = scmp.ne.s32.totalorder %s158, %s159
      %p171 = scmp.eq.s32.totalorder %s23, 3
      %p172 = por %p170, %p171
      %p174 = scmp.ne.s32.totalorder %s159, %s173
      %p175 = scmp.eq.s32.totalorder %s23, 0
      %p176 = por %p174, %p175
      %s178 = sadd.s32 %s177, 1
      %p181 = scmp.eq.s32.totalorder %s17, 3
      %p182 = scmp.ne.s32.totalorder %s177, %s179
      %p183 = scmp.eq.s32.totalorder %s17, 0
      %p184 = por %p182, %p183
      %p185 = scmp.ne.s32.totalorder %s177, %s179
      %p186 = scmp.eq.s32.totalorder %s22, 3
      %p187 = por %p185, %p186
      %p188 = scmp.ne.s32.totalorder %s179, %s180
      %p189 = scmp.eq.s32.totalorder %s22, 0
      %p190 = por %p188, %p189
      %p191 = scmp.ne.s32.totalorder %s179, %s180
      %p192 = scmp.eq.s32.totalorder %s23, 3
      %p193 = por %p191, %p192
      %p195 = scmp.ne.s32.totalorder %s180, %s194
      %p196 = scmp.eq.s32.totalorder %s23, 0
      %p197 = por %p195, %p196
      %s199 = sadd.s32 %s198, 1
      %p202 = scmp.eq.s32.totalorder %s17, 3
      %p203 = scmp.ne.s32.totalorder %s198, %s200
      %p204 = scmp.eq.s32.totalorder %s17, 0
      %p205 = por %p203, %p204
      %p206 = scmp.ne.s32.totalorder %s198, %s200
      %p207 = scmp.eq.s32.totalorder %s22, 3
      %p208 = por %p206, %p207
      %p209 = scmp.ne.s32.totalorder %s200, %s201
      %p210 = scmp.eq.s32.totalorder %s22, 0
      %p211 = por %p209, %p210
      %p212 = scmp.ne.s32.totalorder %s200, %s201
      %p213 = scmp.eq.s32.totalorder %s23, 3
      %p214 = por %p212, %p213
      %p216 = scmp.ne.s32.totalorder %s201, %s215
      %p217 = scmp.eq.s32.totalorder %s23, 0
      %p218 = por %p216, %p217
      %s219 = ssub.s32 %s24, %s36
      %s220 = ssub.s32 %s25, %s32
      %s221 = sor.u32 %s219, %s220
      %p222 = scmp.eq.s32.totalorder %s221, 0
      %s224 = sadd.s32 %s223, 1
      %s225 = scalar_select %p222, %s223, %s224
      %p228 = pneg %p222
      %p229 = scmp.eq.s32.totalorder %s17, 3
      %p230 = por %p228, %p229
      %p231 = scmp.ne.s32.totalorder %s223, %s226
      %p232 = scmp.eq.s32.totalorder %s17, 0
      %p233 = por %p231, %p232
      %p234 = scmp.ne.s32.totalorder %s223, %s226
      %p235 = scmp.eq.s32.totalorder %s22, 3
      %p236 = por %p234, %p235
      %p237 = scmp.ne.s32.totalorder %s226, %s227
      %p238 = scmp.eq.s32.totalorder %s22, 0
      %p239 = por %p237, %p238
      %p240 = scmp.ne.s32.totalorder %s226, %s227
      %p241 = scmp.eq.s32.totalorder %s23, 3
      %p242 = por %p240, %p241
      %p244 = scmp.ne.s32.totalorder %s227, %s243
      %p245 = scmp.eq.s32.totalorder %s23, 0
      %p246 = por %p244, %p245
      %p247 = scmp.le.s32.totalorder 1, %s17
      %p248 = scmp.lt.s32.totalorder %s17, 5
      %p249 = pnand %p247, %p248
      %p250 = pneg %p249
      // Predicated region
      $region9: #{residual_unit.1} parent=5 // pred_check
        _
      $region10: #{residual_unit.1} parent=5 // pred_check_branch
        %252 = sbr.rel (%p249) target = $region12
      $region11: #{residual_unit.1} parent=5 // pred_region
        %s253 = ssub.s32 %s17, 1
        // Predicated region
        $region13: #{residual_unit.1} parent=11 // pred_check
          %p254 = pneg %p106
        $region14: #{residual_unit.1} parent=11 // pred_check_branch
          %256 = sbr.rel (%p254) target = $region16
        $region15: #{residual_unit.1} parent=11 // pred_region
          _
        $region16: #{residual_unit.1} parent=11 // pred_fallthru
          _
        // Predicated region
        $region17: #{residual_unit.1} parent=11 // pred_check
          %p257 = pneg %p127
        $region18: #{residual_unit.1} parent=11 // pred_check_branch
          %259 = sbr.rel (%p257) target = $region20
        $region19: #{residual_unit.1} parent=11 // pred_region
          _
        $region20: #{residual_unit.1} parent=11 // pred_fallthru
          _
        // Predicated region
        $region21: #{residual_unit.1} parent=11 // pred_check
          %p260 = pneg %p148
        $region22: #{residual_unit.1} parent=11 // pred_check_branch
          %262 = sbr.rel (%p260) target = $region24
        $region23: #{residual_unit.1} parent=11 // pred_region
          _
        $region24: #{residual_unit.1} parent=11 // pred_fallthru
          _
        // Predicated region
        $region25: #{residual_unit.1} parent=11 // pred_check
          %p263 = pneg %p169
        $region26: #{residual_unit.1} parent=11 // pred_check_branch
          %265 = sbr.rel (%p263) target = $region28
        $region27: #{residual_unit.1} parent=11 // pred_region
          _
        $region28: #{residual_unit.1} parent=11 // pred_fallthru
          _
        // Predicated region
        $region29: #{residual_unit.1} parent=11 // pred_check
          %p266 = pneg %p190
        $region30: #{residual_unit.1} parent=11 // pred_check_branch
          %268 = sbr.rel (%p266) target = $region32
        $region31: #{residual_unit.1} parent=11 // pred_region
          _
        $region32: #{residual_unit.1} parent=11 // pred_fallthru
          _
        // Predicated region
        $region33: #{residual_unit.1} parent=11 // pred_check
          %p269 = pneg %p211
        $region34: #{residual_unit.1} parent=11 // pred_check_branch
          %271 = sbr.rel (%p269) target = $region36
        $region35: #{residual_unit.1} parent=11 // pred_region
          _
        $region36: #{residual_unit.1} parent=11 // pred_fallthru
          _
      $region12: #{residual_unit.1} parent=5 // pred_fallthru
        _
      %p272 = scmp.lt.s32.totalorder %s17, 4
      // Predicated region
      $region37: #{residual_unit.1} parent=5 // pred_check
        %p273 = pneg %p272
      $region38: #{residual_unit.1} parent=5 // pred_check_branch
        %275 = sbr.rel (%p273) target = $region40
      $region39: #{residual_unit.1} parent=5 // pred_region
        // Predicated region
        $region41: #{residual_unit.1} parent=39 // pred_check
          %p276 = pneg %p51
        $region42: #{residual_unit.1} parent=39 // pred_check_branch
          %278 = sbr.rel (%p276) target = $region44
        $region43: #{residual_unit.1} parent=39 // pred_region
          %s279 = sand.u32 %s41, 1
          %s280 = sand.u32 %s41, 1
          %s281 = smul.addr %s280, 16
          %s282 = scalar_lea.vmem [#allocation2], %s281
          %s283 = smul.addr %s24, 4
          %s284 = sadd.s32 %s25, %s283
          %s285 = smul.addr %s284, 8
          %s286 = scalar_lea.vmem %s0, %s285
          // Predicated region
          $region45: #{residual_unit.1} parent=43 // pred_check
            _
          $region46: #{residual_unit.1} parent=43 // pred_check_branch
            %288 = sbr.rel (0) target = $region48
          $region47: #{residual_unit.1} parent=43 // pred_region
            // Predicated region
            $region49: #{residual_unit.1} parent=47 // pred_check
              _
            $region50: #{residual_unit.1} parent=47 // pred_check_branch
              %290 = sbr.rel (0) target = $region52
            $region51: #{residual_unit.1} parent=47 // pred_region
              // Predicated region
              $region64: #{residual_unit.1} parent=51 // pred_check
                _
              $region65: #{residual_unit.1} parent=51 // pred_check_branch
                %307 = sbr.rel (0) target = $region67
              $region66: #{residual_unit.1} parent=51 // pred_region
                loop: start=0, step=1, limit=1
                $region68: #{residual_unit.1} parent=66 // loop_pre_header
                  _
                $region69: #{residual_unit.1} parent=66 // loop_header
                  %s309 = sphi 0, %s313
                  %p310 = scmp.ge.s32.totalorder %s309, 1
                  %s314 = sphi %s286, %s286
                  %s315 = sphi %s282, %s282
                $region70: #{residual_unit.1} parent=66 // loop_header_branch
                  %312 = sbr.rel (%p310) target = $region74
                $region71: #{residual_unit.1} parent=66 // loop_body
                  %v316 = vld [vmem:[%s314] sm:$0xff]
                  %317 = vst [vmem:[%s315] sm:$0xff] %v316
                  %v318 = vld [vmem:[%s314 + $0x10] sm:$0xff]
                  %319 = vst [vmem:[%s315 + $0x8] sm:$0xff] %v318
                $region72: #{residual_unit.1} parent=66 // loop_footer
                  %s313 = sadd.s32 1, %s309
                $region73: #{residual_unit.1} parent=66 // loop_footer_branch
                  %308 = sbr.rel target = $region69
                $region74: #{residual_unit.1} parent=66 // loop_exit
                  _
              $region67: #{residual_unit.1} parent=51 // pred_fallthru
                _
              // Predicated region
              $region75: #{residual_unit.1} parent=51 // pred_check
                _
              $region76: #{residual_unit.1} parent=51 // pred_check_branch
                %321 = sbr.rel target = $region78
              $region77: #{residual_unit.1} parent=51 // pred_region
                _
              $region78: #{residual_unit.1} parent=51 // pred_fallthru
                _
            $region52: #{residual_unit.1} parent=47 // pred_fallthru
              _
            // Predicated region
            $region53: #{residual_unit.1} parent=47 // pred_check
              _
            $region54: #{residual_unit.1} parent=47 // pred_check_branch
              %292 = sbr.rel target = $region56
            $region55: #{residual_unit.1} parent=47 // pred_region
              loop: start=0, step=1, limit=1
              $region57: #{residual_unit.1} parent=55 // loop_pre_header
                _
              $region58: #{residual_unit.1} parent=55 // loop_header
                %s295 = sphi 0, %s299
                %p296 = scmp.ge.s32.totalorder %s295, 1
                %s300 = sphi %s286, %s286
                %s301 = sphi %s282, %s282
              $region59: #{residual_unit.1} parent=55 // loop_header_branch
                %298 = sbr.rel (%p296) target = $region63
              $region60: #{residual_unit.1} parent=55 // loop_body
                %v302 = vld [vmem:[%s300] sm:$0xff]
                %303 = vst [vmem:[%s301] sm:$0xff] %v302
                %v304 = vld [vmem:[%s300 + $0x10] sm:$0xff]
                %305 = vst [vmem:[%s301 + $0x8] sm:$0xff] %v304
              $region61: #{residual_unit.1} parent=55 // loop_footer
                %s299 = sadd.s32 1, %s295
              $region62: #{residual_unit.1} parent=55 // loop_footer_branch
                %294 = sbr.rel target = $region58
              $region63: #{residual_unit.1} parent=55 // loop_exit
                _
            $region56: #{residual_unit.1} parent=47 // pred_fallthru
              _
          $region48: #{residual_unit.1} parent=43 // pred_fallthru
            _
          %322 = vnop
        $region44: #{residual_unit.1} parent=39 // pred_fallthru
          _
        // Predicated region
        $region79: #{residual_unit.1} parent=39 // pred_check
          %p323 = pneg %p79
        $region80: #{residual_unit.1} parent=39 // pred_check_branch
          %325 = sbr.rel (%p323) target = $region82
        $region81: #{residual_unit.1} parent=39 // pred_region
          %p326 = scmp.lt.s32.totalorder %s24, 1
          %s327 = scalar_select %p326, %s24, 1
          %p328 = scmp.lt.s32.totalorder %s25, 1
          %s329 = scalar_select %p328, %s25, 1
          %s330 = smul.addr %s329, 2
          %s331 = smul.addr %s327, 4
          %s332 = sadd.s32 %s330, %s331
          %s333 = smul.addr %s332, 8
          %s334 = scalar_lea.vmem %s1, %s333
        $region82: #{residual_unit.1} parent=39 // pred_fallthru
          _
      $region40: #{residual_unit.1} parent=5 // pred_fallthru
        _
      %p335 = scmp.le.s32.totalorder 1, %s17
      %p336 = scmp.lt.s32.totalorder %s17, 5
      %p337 = pnand %p335, %p336
      %p338 = pneg %p337
      // Predicated region
      $region83: #{residual_unit.1} parent=5 // pred_check
        _
      $region84: #{residual_unit.1} parent=5 // pred_check_branch
        %340 = sbr.rel (%p337) target = $region86
      $region85: #{residual_unit.1} parent=5 // pred_region
        %s341 = ssub.s32 %s17, 1
        %s342 = sand.u32 %s44, 1
        %s343 = sand.u32 %s44, 1
        %s344 = smul.addr %s343, 16
        %s345 = scalar_lea.vmem [#allocation2], %s344
        // Predicated region
        $region87: #{residual_unit.1} parent=85 // pred_check
          %p346 = pneg %p57
        $region88: #{residual_unit.1} parent=85 // pred_check_branch
          %348 = sbr.rel (%p346) target = $region90
        $region89: #{residual_unit.1} parent=85 // pred_region
          _
        $region90: #{residual_unit.1} parent=85 // pred_fallthru
          _
        %s349 = sand.u32 %s44, 1
        %s350 = sand.u32 %s44, 1
        %s351 = smul.addr %s350, 16
        %s352 = scalar_lea.vmem [#allocation2], %s351
        %p353 = pneg %p57
        %p354 = pneg %p54
        %p355 = scmp.lt.s32.totalorder %s26, 1
        %s356 = scalar_select %p355, %s26, 1
        %p357 = scmp.lt.s32.totalorder %s27, 1
        %s358 = scalar_select %p357, %s27, 1
        %s359 = smul.addr %s358, 2
        %s360 = smul.addr %s356, 4
        %s361 = sadd.s32 %s359, %s360
        %s362 = smul.addr %s361, 8
        %s363 = scalar_lea.vmem %s1, %s362
        %p364 = pneg %p85
        %p365 = pneg %p82
        %p366 = pneg %p106
        %p367 = pneg %p103
        %p368 = pneg %p127
        %p369 = pneg %p124
        %p370 = pneg %p148
        %p371 = pneg %p145
        %p372 = pneg %p169
        %p373 = pneg %p166
        %p374 = pneg %p190
        %p375 = pneg %p187
        %p376 = pneg %p211
        %p377 = pneg %p208
        %p378 = pneg %p239
        %p379 = pneg %p236
        %s380 = sand.u32 %s226, 1
        %s381 = scalar_lea.sflag [#allocation4], %s380
        %s382 = sand.u32 %s226, 1
        %s383 = smul.addr %s382, 16
        %s384 = scalar_lea.vmem [#allocation3], %s383
        %p385 = scmp.lt.s32.totalorder %s26, 1
        %s386 = scalar_select %p385, %s26, 1
        %p387 = scmp.lt.s32.totalorder %s27, 1
        %s388 = scalar_select %p387, %s27, 1
        %s389 = smul.addr %s388, 2
        %s390 = smul.addr %s386, 4
        %s391 = sadd.s32 %s389, %s390
        %s392 = smul.addr %s391, 8
        %s393 = scalar_lea.vmem %s1, %s392
        %v394 = vld [vmem:[%s345] sm:$0xff]
        %v395 = vld [vmem:[%s345 + $0x8] sm:$0xff]
        %v396 = vld [vmem:[%s2] sm:$0xff]
        %v397 = vld [vmem:[%s2 + $0x8] sm:$0xff]
        %v398 = vadd.f32 %v396, 1e-09
        %v399 = vadd.f32 %v397, 1e-09
        %v400 = vrcp.pop %v398
        %v401 = vmul.f32 1.0, %v400
        %v402 = vrcp.pop %v399
        %v403 = vmul.f32 1.0, %v402
        %v404 = vld [vmem:[%s393] sm:$0xff]
        %v405 = vld [vmem:[%s393 + $0x8] sm:$0xff]
        %408 = vrot.lane.b32.xlu0 %v394, 3
        %v409 = vpop.permute.xlu0 %408
        %410 = vrot.lane.b32.xlu0 %v395, 3
        %v411 = vpop.permute.xlu0 %410
        %vm414 = vcmask 23552
        %v415 = vsel %vm414, %v404, %v409
        %v416 = vsel %vm414, %v405, %v411
        %v417 = vsel %vm414, %v409, %v404
        %v418 = vsel %vm414, %v411, %v405
        %420 = vset.pattern.permute.xlu0 0
        %421 = vperm.xlu0 %420, %v396
        %v422 = vpop.permute.xlu0 %421
        %425 = vset.pattern.permute.xlu0 0
        %426 = vperm.xlu0 %425, %v397
        %v427 = vpop.permute.xlu0 %426
        %v429 = vmul.f32 %v422, %v415
        %v430 = vmul.f32 %v422, %v417
        %v431 = vmul.f32 %v427, %v416
        %v432 = vmul.f32 %v427, %v418
        %v433 = vand.u32 2147483647, %v429
        %vm434 = vcmp.le.f32.partialorder %v433, 0.7853982
        %vm435 = vcmp.lt.s32.totalorder %v429, 0
        %v436 = vand.u32 %v429, 2139095040
        %v437 = vshrl.u32 %v436, 23
        %v438 = vsub.s32 %v437, 127
        %v439 = vand.u32 2147483647, %v429
        %v440 = vand.u32 %v439, 8388607
        %v441 = vor.u32 %v440, 8388608
        %v442 = vsub.s32 0, %v441
        %v443 = vadd.s32 %v438, 1
        %vm444 = vcmp.gt.s32.totalorder %v443, 0
        %v445 = vsel %vm444, %v443, 0
        %v446 = vshrl.u32 %v445, 5
        %v447 = vand.u32 %v445, 31
        %v448 = vsub.s32 32, %v447
        %v449 = vshrl.u32 683565275, %v448
        %v450 = vshll.u32 683565275, %v447
        %v451 = vshrl.u32 2475754826, %v448
        %v452 = vor.u32 %v450, %v451
        %v453 = vshll.u32 2475754826, %v447
        %v454 = vshrl.u32 2131351028, %v448
        %v455 = vor.u32 %v453, %v454
        %v456 = vshll.u32 2131351028, %v447
        %v457 = vshrl.u32 2102212464, %v448
        %v458 = vor.u32 %v456, %v457
        %v459 = vshll.u32 2102212464, %v447
        %v460 = vshrl.u32 920167782, %v448
        %v461 = vor.u32 %v459, %v460
        %v462 = vshll.u32 920167782, %v447
        %v463 = vshrl.u32 1326507024, %v448
        %v464 = vor.u32 %v462, %v463
        %vm465 = vcmp.lt.s32.totalorder %v446, 1
        %vm466 = vcmp.lt.s32.totalorder %v446, 2
        %vm467 = vcmp.lt.s32.totalorder %v446, 3
        %vm468 = vcmp.lt.s32.totalorder %v446, 4
        %v469 = vsel %vm465, %v449, %v452
        %v470 = vsel %vm468, %v458, 2102212464
        %v471 = vsel %vm467, %v455, %v470
        %v472 = vsel %vm466, %v469, %v471
        %v473 = vsel %vm465, %v452, %v455
        %v474 = vsel %vm468, %v461, 920167782
        %v475 = vsel %vm467, %v458, %v474
        %v476 = vsel %vm466, %v473, %v475
        %v477 = vsel %vm465, %v455, %v458
        %v478 = vsel %vm468, %v464, 1326507024
        %v479 = vsel %vm467, %v461, %v478
        %v480 = vsel %vm466, %v477, %v479
        %v481 = vshll.u32 %v441, 8
        %v482 = vmul.u32.u64.compose %v481, %v480
        %v483 = vextract.low.u32 %v482
        %v484 = vextract.high.u32 %v482
        %v485 = vmul.u32.u64.compose %v481, %v476
        %v486 = vextract.low.u32 %v485
        %v487 = vextract.high.u32 %v485
        %v488 = vmul.u32 %v481, %v472
        %v489 = vadd.s32 %v484, %v486
        %vm490 = vc.u32 %v484, %v486
        %v491 = vadd.s32 %v487, 1
        %v492 = vsel %vm490, %v491, %v487
        %v493 = vadd.s32 %v488, %v492
        %v494 = vadd.s32 %v493, 536870912
        %v495 = vshrl.u32 %v494, 30
        %v496 = vshll.u32 %v495, 30
        %v497 = vsub.s32 %v493, %v496
        %vm498 = vcmp.lt.s32.totalorder %v497, 0
        %v499 = vsub.s32 0, %v497
        %v500 = vsel %vm498, %v499, %v497
        %v501 = vclz %v500
        %v502 = vsub.s32 %v501, 2
        %vm503 = vcmp.gt.s32.totalorder 0, %v502
        %v504 = vsel %vm503, 0, %v502
        %v505 = vsub.s32 32, %v504
        %v506 = vshll.u32 %v497, %v504
        %v507 = vshrl.u32 %v489, %v505
        %v508 = vor.u32 %v506, %v507
        %v509 = vsub.s32 4294967266, %v504
        %v510 = vadd.s32 %v509, 127
        %v511 = vshll.u32 %v510, 23
        %v512 = vor.u32 4788187, %v511
        %v513 = vand.u32 2147483647, %v512
        %v515 = vcvt.s32.f32 %v508
        %v516 = vmul.f32 %v515, %v513
        %v517 = vxor.u32 %v516, 2147483648
        %v518 = vsel %vm435, %v517, %v516
        %v519 = vsub.s32 4, %v495
        %v520 = vsel %vm435, %v519, %v495
        %v521 = vsel %vm434, %v429, %v518
        %v522 = vsel %vm434, 0, %v520
        %v523 = vcosq.f32.pop %v521
        %v524 = vsinq.f32.pop %v521
        %vm525 = vweird.f32 %v429
        %v526 = vadd.s32 %v522, 3
        %v527 = vand.u32 %v526, 3
        %vm528 = vcmp.lt.s32.totalorder %v527, 2
        %vm529 = vcmp.eq.s32.totalorder %v527, 0
        %v530 = vxor.u32 %v524, 2147483648
        %v531 = vsel %vm529, %v523, %v530
        %vm532 = vcmp.eq.s32.totalorder %v527, 2
        %v533 = vxor.u32 %v523, 2147483648
        %v534 = vsel %vm532, %v533, %v524
        %v535 = vsel %vm528, %v531, %v534
        %v536 = vsel %vm525, nan, %v535
        %v537 = vand.u32 2147483647, %v430
        %vm538 = vcmp.le.f32.partialorder %v537, 0.7853982
        %vm539 = vcmp.lt.s32.totalorder %v430, 0
        %v540 = vand.u32 %v430, 2139095040
        %v541 = vshrl.u32 %v540, 23
        %v542 = vsub.s32 %v541, 127
        %v543 = vand.u32 2147483647, %v430
        %v544 = vand.u32 %v543, 8388607
        %v545 = vor.u32 %v544, 8388608
        %v546 = vsub.s32 0, %v545
        %v547 = vadd.s32 %v542, 1
        %vm548 = vcmp.gt.s32.totalorder %v547, 0
        %v549 = vsel %vm548, %v547, 0
        %v550 = vshrl.u32 %v549, 5
        %v551 = vand.u32 %v549, 31
        %v552 = vsub.s32 32, %v551
        %v553 = vshrl.u32 683565275, %v552
        %v554 = vshll.u32 683565275, %v551
        %v555 = vshrl.u32 2475754826, %v552
        %v556 = vor.u32 %v554, %v555
        %v557 = vshll.u32 2475754826, %v551
        %v558 = vshrl.u32 2131351028, %v552
        %v559 = vor.u32 %v557, %v558
        %v560 = vshll.u32 2131351028, %v551
        %v561 = vshrl.u32 2102212464, %v552
        %v562 = vor.u32 %v560, %v561
        %v563 = vshll.u32 2102212464, %v551
        %v564 = vshrl.u32 920167782, %v552
        %v565 = vor.u32 %v563, %v564
        %v566 = vshll.u32 920167782, %v551
        %v567 = vshrl.u32 1326507024, %v552
        %v568 = vor.u32 %v566, %v567
        %vm569 = vcmp.lt.s32.totalorder %v550, 1
        %vm570 = vcmp.lt.s32.totalorder %v550, 2
        %vm571 = vcmp.lt.s32.totalorder %v550, 3
        %vm572 = vcmp.lt.s32.totalorder %v550, 4
        %v573 = vsel %vm569, %v553, %v556
        %v574 = vsel %vm572, %v562, 2102212464
        %v575 = vsel %vm571, %v559, %v574
        %v576 = vsel %vm570, %v573, %v575
        %v577 = vsel %vm569, %v556, %v559
        %v578 = vsel %vm572, %v565, 920167782
        %v579 = vsel %vm571, %v562, %v578
        %v580 = vsel %vm570, %v577, %v579
        %v581 = vsel %vm569, %v559, %v562
        %v582 = vsel %vm572, %v568, 1326507024
        %v583 = vsel %vm571, %v565, %v582
        %v584 = vsel %vm570, %v581, %v583
        %v585 = vshll.u32 %v545, 8
        %v586 = vmul.u32.u64.compose %v585, %v584
        %v587 = vextract.low.u32 %v586
        %v588 = vextract.high.u32 %v586
        %v589 = vmul.u32.u64.compose %v585, %v580
        %v590 = vextract.low.u32 %v589
        %v591 = vextract.high.u32 %v589
        %v592 = vmul.u32 %v585, %v576
        %v593 = vadd.s32 %v588, %v590
        %vm594 = vc.u32 %v588, %v590
        %v595 = vadd.s32 %v591, 1
        %v596 = vsel %vm594, %v595, %v591
        %v597 = vadd.s32 %v592, %v596
        %v598 = vadd.s32 %v597, 536870912
        %v599 = vshrl.u32 %v598, 30
        %v600 = vshll.u32 %v599, 30
        %v601 = vsub.s32 %v597, %v600
        %vm602 = vcmp.lt.s32.totalorder %v601, 0
        %v603 = vsub.s32 0, %v601
        %v604 = vsel %vm602, %v603, %v601
        %v605 = vclz %v604
        %v606 = vsub.s32 %v605, 2
        %vm607 = vcmp.gt.s32.totalorder 0, %v606
        %v608 = vsel %vm607, 0, %v606
        %v609 = vsub.s32 32, %v608
        %v610 = vshll.u32 %v601, %v608
        %v611 = vshrl.u32 %v593, %v609
        %v612 = vor.u32 %v610, %v611
        %v613 = vsub.s32 4294967266, %v608
        %v614 = vadd.s32 %v613, 127
        %v615 = vshll.u32 %v614, 23
        %v616 = vor.u32 4788187, %v615
        %v617 = vand.u32 2147483647, %v616
        %v619 = vcvt.s32.f32 %v612
        %v620 = vmul.f32 %v619, %v617
        %v621 = vxor.u32 %v620, 2147483648
        %v622 = vsel %vm539, %v621, %v620
        %v623 = vsub.s32 4, %v599
        %v624 = vsel %vm539, %v623, %v599
        %v625 = vsel %vm538, %v430, %v622
        %v626 = vsel %vm538, 0, %v624
        %v627 = vcosq.f32.pop %v625
        %v628 = vsinq.f32.pop %v625
        %vm629 = vweird.f32 %v430
        %v630 = vadd.s32 %v626, 3
        %v631 = vand.u32 %v630, 3
        %vm632 = vcmp.lt.s32.totalorder %v631, 2
        %vm633 = vcmp.eq.s32.totalorder %v631, 0
        %v634 = vxor.u32 %v628, 2147483648
        %v635 = vsel %vm633, %v627, %v634
        %vm636 = vcmp.eq.s32.totalorder %v631, 2
        %v637 = vxor.u32 %v627, 2147483648
        %v638 = vsel %vm636, %v637, %v628
        %v639 = vsel %vm632, %v635, %v638
        %v640 = vsel %vm629, nan, %v639
        %v641 = vand.u32 2147483647, %v431
        %vm642 = vcmp.le.f32.partialorder %v641, 0.7853982
        %vm643 = vcmp.lt.s32.totalorder %v431, 0
        %v644 = vand.u32 %v431, 2139095040
        %v645 = vshrl.u32 %v644, 23
        %v646 = vsub.s32 %v645, 127
        %v647 = vand.u32 2147483647, %v431
        %v648 = vand.u32 %v647, 8388607
        %v649 = vor.u32 %v648, 8388608
        %v650 = vsub.s32 0, %v649
        %v651 = vadd.s32 %v646, 1
        %vm652 = vcmp.gt.s32.totalorder %v651, 0
        %v653 = vsel %vm652, %v651, 0
        %v654 = vshrl.u32 %v653, 5
        %v655 = vand.u32 %v653, 31
        %v656 = vsub.s32 32, %v655
        %v657 = vshrl.u32 683565275, %v656
        %v658 = vshll.u32 683565275, %v655
        %v659 = vshrl.u32 2475754826, %v656
        %v660 = vor.u32 %v658, %v659
        %v661 = vshll.u32 2475754826, %v655
        %v662 = vshrl.u32 2131351028, %v656
        %v663 = vor.u32 %v661, %v662
        %v664 = vshll.u32 2131351028, %v655
        %v665 = vshrl.u32 2102212464, %v656
        %v666 = vor.u32 %v664, %v665
        %v667 = vshll.u32 2102212464, %v655
        %v668 = vshrl.u32 920167782, %v656
        %v669 = vor.u32 %v667, %v668
        %v670 = vshll.u32 920167782, %v655
        %v671 = vshrl.u32 1326507024, %v656
        %v672 = vor.u32 %v670, %v671
        %vm673 = vcmp.lt.s32.totalorder %v654, 1
        %vm674 = vcmp.lt.s32.totalorder %v654, 2
        %vm675 = vcmp.lt.s32.totalorder %v654, 3
        %vm676 = vcmp.lt.s32.totalorder %v654, 4
        %v677 = vsel %vm673, %v657, %v660
        %v678 = vsel %vm676, %v666, 2102212464
        %v679 = vsel %vm675, %v663, %v678
        %v680 = vsel %vm674, %v677, %v679
        %v681 = vsel %vm673, %v660, %v663
        %v682 = vsel %vm676, %v669, 920167782
        %v683 = vsel %vm675, %v666, %v682
        %v684 = vsel %vm674, %v681, %v683
        %v685 = vsel %vm673, %v663, %v666
        %v686 = vsel %vm676, %v672, 1326507024
        %v687 = vsel %vm675, %v669, %v686
        %v688 = vsel %vm674, %v685, %v687
        %v689 = vshll.u32 %v649, 8
        %v690 = vmul.u32.u64.compose %v689, %v688
        %v691 = vextract.low.u32 %v690
        %v692 = vextract.high.u32 %v690
        %v693 = vmul.u32.u64.compose %v689, %v684
        %v694 = vextract.low.u32 %v693
        %v695 = vextract.high.u32 %v693
        %v696 = vmul.u32 %v689, %v680
        %v697 = vadd.s32 %v692, %v694
        %vm698 = vc.u32 %v692, %v694
        %v699 = vadd.s32 %v695, 1
        %v700 = vsel %vm698, %v699, %v695
        %v701 = vadd.s32 %v696, %v700
        %v702 = vadd.s32 %v701, 536870912
        %v703 = vshrl.u32 %v702, 30
        %v704 = vshll.u32 %v703, 30
        %v705 = vsub.s32 %v701, %v704
        %vm706 = vcmp.lt.s32.totalorder %v705, 0
        %v707 = vsub.s32 0, %v705
        %v708 = vsel %vm706, %v707, %v705
        %v709 = vclz %v708
        %v710 = vsub.s32 %v709, 2
        %vm711 = vcmp.gt.s32.totalorder 0, %v710
        %v712 = vsel %vm711, 0, %v710
        %v713 = vsub.s32 32, %v712
        %v714 = vshll.u32 %v705, %v712
        %v715 = vshrl.u32 %v697, %v713
        %v716 = vor.u32 %v714, %v715
        %v717 = vsub.s32 4294967266, %v712
        %v718 = vadd.s32 %v717, 127
        %v719 = vshll.u32 %v718, 23
        %v720 = vor.u32 4788187, %v719
        %v721 = vand.u32 2147483647, %v720
        %v723 = vcvt.s32.f32 %v716
        %v724 = vmul.f32 %v723, %v721
        %v725 = vxor.u32 %v724, 2147483648
        %v726 = vsel %vm643, %v725, %v724
        %v727 = vsub.s32 4, %v703
        %v728 = vsel %vm643, %v727, %v703
        %v729 = vsel %vm642, %v431, %v726
        %v730 = vsel %vm642, 0, %v728
        %v731 = vcosq.f32.pop %v729
        %v732 = vsinq.f32.pop %v729
        %vm733 = vweird.f32 %v431
        %v734 = vadd.s32 %v730, 3
        %v735 = vand.u32 %v734, 3
        %vm736 = vcmp.lt.s32.totalorder %v735, 2
        %vm737 = vcmp.eq.s32.totalorder %v735, 0
        %v738 = vxor.u32 %v732, 2147483648
        %v739 = vsel %vm737, %v731, %v738
        %vm740 = vcmp.eq.s32.totalorder %v735, 2
        %v741 = vxor.u32 %v731, 2147483648
        %v742 = vsel %vm740, %v741, %v732
        %v743 = vsel %vm736, %v739, %v742
        %v744 = vsel %vm733, nan, %v743
        %v745 = vand.u32 2147483647, %v432
        %vm746 = vcmp.le.f32.partialorder %v745, 0.7853982
        %vm747 = vcmp.lt.s32.totalorder %v432, 0
        %v748 = vand.u32 %v432, 2139095040
        %v749 = vshrl.u32 %v748, 23
        %v750 = vsub.s32 %v749, 127
        %v751 = vand.u32 2147483647, %v432
        %v752 = vand.u32 %v751, 8388607
        %v753 = vor.u32 %v752, 8388608
        %v754 = vsub.s32 0, %v753
        %v755 = vadd.s32 %v750, 1
        %vm756 = vcmp.gt.s32.totalorder %v755, 0
        %v757 = vsel %vm756, %v755, 0
        %v758 = vshrl.u32 %v757, 5
        %v759 = vand.u32 %v757, 31
        %v760 = vsub.s32 32, %v759
        %v761 = vshrl.u32 683565275, %v760
        %v762 = vshll.u32 683565275, %v759
        %v763 = vshrl.u32 2475754826, %v760
        %v764 = vor.u32 %v762, %v763
        %v765 = vshll.u32 2475754826, %v759
        %v766 = vshrl.u32 2131351028, %v760
        %v767 = vor.u32 %v765, %v766
        %v768 = vshll.u32 2131351028, %v759
        %v769 = vshrl.u32 2102212464, %v760
        %v770 = vor.u32 %v768, %v769
        %v771 = vshll.u32 2102212464, %v759
        %v772 = vshrl.u32 920167782, %v760
        %v773 = vor.u32 %v771, %v772
        %v774 = vshll.u32 920167782, %v759
        %v775 = vshrl.u32 1326507024, %v760
        %v776 = vor.u32 %v774, %v775
        %vm777 = vcmp.lt.s32.totalorder %v758, 1
        %vm778 = vcmp.lt.s32.totalorder %v758, 2
        %vm779 = vcmp.lt.s32.totalorder %v758, 3
        %vm780 = vcmp.lt.s32.totalorder %v758, 4
        %v781 = vsel %vm777, %v761, %v764
        %v782 = vsel %vm780, %v770, 2102212464
        %v783 = vsel %vm779, %v767, %v782
        %v784 = vsel %vm778, %v781, %v783
        %v785 = vsel %vm777, %v764, %v767
        %v786 = vsel %vm780, %v773, 920167782
        %v787 = vsel %vm779, %v770, %v786
        %v788 = vsel %vm778, %v785, %v787
        %v789 = vsel %vm777, %v767, %v770
        %v790 = vsel %vm780, %v776, 1326507024
        %v791 = vsel %vm779, %v773, %v790
        %v792 = vsel %vm778, %v789, %v791
        %v793 = vshll.u32 %v753, 8
        %v794 = vmul.u32.u64.compose %v793, %v792
        %v795 = vextract.low.u32 %v794
        %v796 = vextract.high.u32 %v794
        %v797 = vmul.u32.u64.compose %v793, %v788
        %v798 = vextract.low.u32 %v797
        %v799 = vextract.high.u32 %v797
        %v800 = vmul.u32 %v793, %v784
        %v801 = vadd.s32 %v796, %v798
        %vm802 = vc.u32 %v796, %v798
        %v803 = vadd.s32 %v799, 1
        %v804 = vsel %vm802, %v803, %v799
        %v805 = vadd.s32 %v800, %v804
        %v806 = vadd.s32 %v805, 536870912
        %v807 = vshrl.u32 %v806, 30
        %v808 = vshll.u32 %v807, 30
        %v809 = vsub.s32 %v805, %v808
        %vm810 = vcmp.lt.s32.totalorder %v809, 0
        %v811 = vsub.s32 0, %v809
        %v812 = vsel %vm810, %v811, %v809
        %v813 = vclz %v812
        %v814 = vsub.s32 %v813, 2
        %vm815 = vcmp.gt.s32.totalorder 0, %v814
        %v816 = vsel %vm815, 0, %v814
        %v817 = vsub.s32 32, %v816
        %v818 = vshll.u32 %v809, %v816
        %v819 = vshrl.u32 %v801, %v817
        %v820 = vor.u32 %v818, %v819
        %v821 = vsub.s32 4294967266, %v816
        %v822 = vadd.s32 %v821, 127
        %v823 = vshll.u32 %v822, 23
        %v824 = vor.u32 4788187, %v823
        %v825 = vand.u32 2147483647, %v824
        %v827 = vcvt.s32.f32 %v820
        %v828 = vmul.f32 %v827, %v825
        %v829 = vxor.u32 %v828, 2147483648
        %v830 = vsel %vm747, %v829, %v828
        %v831 = vsub.s32 4, %v807
        %v832 = vsel %vm747, %v831, %v807
        %v833 = vsel %vm746, %v432, %v830
        %v834 = vsel %vm746, 0, %v832
        %v835 = vcosq.f32.pop %v833
        %v836 = vsinq.f32.pop %v833
        %vm837 = vweird.f32 %v432
        %v838 = vadd.s32 %v834, 3
        %v839 = vand.u32 %v838, 3
        %vm840 = vcmp.lt.s32.totalorder %v839, 2
        %vm841 = vcmp.eq.s32.totalorder %v839, 0
        %v842 = vxor.u32 %v836, 2147483648
        %v843 = vsel %vm841, %v835, %v842
        %vm844 = vcmp.eq.s32.totalorder %v839, 2
        %v845 = vxor.u32 %v835, 2147483648
        %v846 = vsel %vm844, %v845, %v836
        %v847 = vsel %vm840, %v843, %v846
        %v848 = vsel %vm837, nan, %v847
        %v849 = vmul.f32 %v536, %v536
        %v850 = vmul.f32 %v640, %v640
        %v851 = vmul.f32 %v744, %v744
        %v852 = vmul.f32 %v848, %v848
        %854 = vset.pattern.permute.xlu0 0
        %855 = vperm.xlu0 %854, %v401
        %v856 = vpop.permute.xlu0 %855
        %859 = vset.pattern.permute.xlu0 0
        %860 = vperm.xlu0 %859, %v403
        %v861 = vpop.permute.xlu0 %860
        %v863 = vmul.f32 %v856, %v849
        %v864 = vmul.f32 %v856, %v850
        %v865 = vmul.f32 %v861, %v851
        %v866 = vmul.f32 %v861, %v852
        %v867 = vadd.f32 %v415, %v863
        %v868 = vadd.f32 %v417, %v864
        %v869 = vadd.f32 %v416, %v865
        %v870 = vadd.f32 %v418, %v866
        %875 = vrot.lane.b32.xlu0 %v867, 127
        %v876 = vpop.permute.xlu0 %875
        %877 = vrot.lane.b32.xlu0 %v868, 127
        %v878 = vpop.permute.xlu0 %877
        %879 = vrot.lane.b32.xlu0 %v869, 127
        %v880 = vpop.permute.xlu0 %879
        %881 = vrot.lane.b32.xlu0 %v870, 127
        %v882 = vpop.permute.xlu0 %881
        %vm883 = vcmask 1039360
        %v884 = vsel %vm883, %v876, %v878
        %v885 = vsel %vm883, %v880, %v882
        %888 = vrot.lane.b32.xlu0 %v867, 126
        %v889 = vpop.permute.xlu0 %888
        %890 = vrot.lane.b32.xlu0 %v868, 126
        %v891 = vpop.permute.xlu0 %890
        %892 = vrot.lane.b32.xlu0 %v869, 126
        %v893 = vpop.permute.xlu0 %892
        %894 = vrot.lane.b32.xlu0 %v870, 126
        %v895 = vpop.permute.xlu0 %894
        %vm896 = vcmask 1031168
        %v897 = vsel %vm896, %v889, %v891
        %v898 = vsel %vm896, %v893, %v895
        %901 = vrot.lane.b32.xlu0 %v867, 125
        %v902 = vpop.permute.xlu0 %901
        %903 = vrot.lane.b32.xlu0 %v868, 125
        %v904 = vpop.permute.xlu0 %903
        %905 = vrot.lane.b32.xlu0 %v869, 125
        %v906 = vpop.permute.xlu0 %905
        %907 = vrot.lane.b32.xlu0 %v870, 125
        %v908 = vpop.permute.xlu0 %907
        %vm909 = vcmask 1022976
        %v910 = vsel %vm909, %v902, %v904
        %v911 = vsel %vm909, %v906, %v908
        %914 = vrot.lane.b32.xlu0 %v867, 124
        %v915 = vpop.permute.xlu0 %914
        %916 = vrot.lane.b32.xlu0 %v868, 124
        %v917 = vpop.permute.xlu0 %916
        %918 = vrot.lane.b32.xlu0 %v869, 124
        %v919 = vpop.permute.xlu0 %918
        %920 = vrot.lane.b32.xlu0 %v870, 124
        %v921 = vpop.permute.xlu0 %920
        %vm922 = vcmask 1014784
        %v923 = vsel %vm922, %v915, %v917
        %v924 = vsel %vm922, %v919, %v921
        %927 = vrot.lane.b32.xlu0 %v867, 123
        %v928 = vpop.permute.xlu0 %927
        %929 = vrot.lane.b32.xlu0 %v868, 123
        %v930 = vpop.permute.xlu0 %929
        %931 = vrot.lane.b32.xlu0 %v869, 123
        %v932 = vpop.permute.xlu0 %931
        %933 = vrot.lane.b32.xlu0 %v870, 123
        %v934 = vpop.permute.xlu0 %933
        %vm935 = vcmask 1006592
        %v936 = vsel %vm935, %v928, %v930
        %v937 = vsel %vm935, %v932, %v934
        %940 = vrot.lane.b32.xlu0 %v867, 122
        %v941 = vpop.permute.xlu0 %940
        %942 = vrot.lane.b32.xlu0 %v868, 122
        %v943 = vpop.permute.xlu0 %942
        %944 = vrot.lane.b32.xlu0 %v869, 122
        %v945 = vpop.permute.xlu0 %944
        %946 = vrot.lane.b32.xlu0 %v870, 122
        %v947 = vpop.permute.xlu0 %946
        %vm948 = vcmask 998400
        %v949 = vsel %vm948, %v941, %v943
        %v950 = vsel %vm948, %v945, %v947
        %v953 = vld [vmem:[%s3] sm:$0xff]
        %v954 = vld [vmem:[%s3 + $0x8] sm:$0xff]
        %v955 = vld [vmem:[%s4] sm:$0xff]
        %v956 = vld [vmem:[%s4 + $0x8] sm:$0xff]
        %958 = vset.pattern.permute.xlu0 0
        %959 = vperm.xlu0 %958, %v955
        %v960 = vpop.permute.xlu0 %959
        %963 = vset.pattern.permute.xlu0 0
        %964 = vperm.xlu0 %963, %v956
        %v965 = vpop.permute.xlu0 %964
        %vm967 = vcmask 916480
        %v969 = vsel %vm967, %v953, 0
        %v972 = vsel %vm967, %v954, 0
        %974 = vmatprep.subr.mxu0 0.0
        %975 = vmatpush1.msra.mxu0 %v867
        %976 = vmatprep.subr.mxu0 0.0
        %977 = vmatpush1.msra.mxu0 %v869
        %978 = vmatprep.subr.mxu0 0.0
        %979 = vmatpush1.msra.mxu0 %v884
        %980 = vmatprep.subr.mxu0 0.0
        %981 = vmatpush1.msra.mxu0 %v885
        %982 = vmatprep.subr.mxu0 0.0
        %983 = vmatpush1.msra.mxu0 %v897
        %984 = vmatprep.subr.mxu0 0.0
        %985 = vmatpush1.msra.mxu0 %v898
        %986 = vmatprep.subr.mxu0 0.0
        %987 = vmatpush1.msra.mxu0 %v910
        %988 = vmatprep.subr.mxu0 0.0
        %989 = vmatpush1.msra.mxu0 %v911
        %990 = vmatprep.subr.mxu0 0.0
        %991 = vmatpush1.msra.mxu0 %v923
        %992 = vmatprep.subr.mxu0 0.0
        %993 = vmatpush1.msra.mxu0 %v924
        %994 = vmatprep.subr.mxu0 0.0
        %995 = vmatpush1.msra.mxu0 %v936
        %996 = vmatprep.subr.mxu0 0.0
        %997 = vmatpush1.msra.mxu0 %v937
        %998 = vmatprep.subr.mxu0 0.0
        %999 = vmatpush1.msra.mxu0 %v949
        %1000 = vmatprep.subr.mxu0 0.0
        %1001 = vmatpush1.msra.mxu0 %v950
        %1002 = vmatprep.subr.mxu0 0.0
        %1003 = vmatpush1.msra.mxu0 0.0
        %1004 = vmatprep.subr.mxu0 0.0
        %1005 = vmatpush1.msra.mxu0 0.0
        %1006 = vmatprep.subr.mxu0 0.0
        %1007 = vmatpush1.msra.mxu0 0.0
        %1008 = vmatprep.subr.mxu0 0.0
        %1009 = vmatpush1.msra.mxu0 0.0
        %1010 = vmatprep.subr.mxu0 0.0
        %1011 = vmatpush1.msra.mxu0 0.0
        %1012 = vmatprep.subr.mxu0 0.0
        %1013 = vmatpush1.msra.mxu0 0.0
        %1014 = vmatprep.subr.mxu0 0.0
        %1015 = vmatpush1.msra.mxu0 0.0
        %1016 = vmatprep.subr.mxu0 0.0
        %1017 = vmatpush1.msra.mxu0 0.0
        %1018 = vmatprep.subr.mxu0 0.0
        %1019 = vmatpush1.msra.mxu0 0.0
        %1020 = vmatprep.subr.mxu0 0.0
        %1021 = vmatpush1.msra.mxu0 0.0
        %1022 = vmatprep.subr.mxu0 0.0
        %1023 = vmatpush1.msra.mxu0 0.0
        %1024 = vmatprep.subr.mxu0 0.0
        %1025 = vmatpush1.msra.mxu0 0.0
        %1026 = vmatprep.subr.mxu0 0.0
        %1027 = vmatpush1.msra.mxu0 0.0
        %1028 = vmatprep.subr.mxu0 0.0
        %1029 = vmatpush1.msra.mxu0 0.0
        %1030 = vmatprep.subr.mxu0 0.0
        %1031 = vmatpush1.msra.mxu0 0.0
        %1032 = vmatprep.subr.mxu0 0.0
        %1033 = vmatpush1.msra.mxu0 0.0
        %1034 = vmatprep.subr.mxu0 0.0
        %1035 = vmatpush1.msra.mxu0 0.0
        %1036 = vmatprep.subr.mxu0 0.0
        %1037 = vmatpush1.msra.mxu0 0.0
        %1038 = vmatprep.mubr.f32.mxu0 0.0
        %1039 = vmatmul.mubr.f32.gmra.mrb[0].mxu0 %v969
        %v1040 = vpop.f32.mrb[0].mxu0
        %v1041 = vadd.f32 %v960, %v1040
        %v1042 = vpop.f32.mrb[0].mxu0
        %1043 = vmatprep.mubr.f32.mxu0 0.0
        %1044 = vmatmul.mubr.f32.gmra.mrb[0].mxu0 %v972
        %v1045 = vpop.f32.mrb[0].mxu0
        %v1046 = vadd.f32 %v965, %v1045
        %v1047 = vpop.f32.mrb[0].mxu0
        %1048 = vdwg.mxu0
        %v1049 = vld [vmem:[%s5] sm:$0xff]
        %v1050 = vld [vmem:[%s5 + $0x8] sm:$0xff]
        %v1051 = vadd.f32 %v1049, 1e-09
        %v1052 = vadd.f32 %v1050, 1e-09
        %v1053 = vrcp.pop %v1051
        %v1054 = vmul.f32 1.0, %v1053
        %v1055 = vrcp.pop %v1052
        %v1056 = vmul.f32 1.0, %v1055
        %1058 = vset.pattern.permute.xlu0 0
        %1059 = vperm.xlu0 %1058, %v1049
        %v1060 = vpop.permute.xlu0 %1059
        %1063 = vset.pattern.permute.xlu0 0
        %1064 = vperm.xlu0 %1063, %v1050
        %v1065 = vpop.permute.xlu0 %1064
        %v1067 = vmul.f32 %v1060, %v1041
        %v1068 = vmul.f32 %v1065, %v1046
        %v1069 = vand.u32 2147483647, %v1067
        %vm1070 = vcmp.le.f32.partialorder %v1069, 0.7853982
        %vm1071 = vcmp.lt.s32.totalorder %v1067, 0
        %v1072 = vand.u32 %v1067, 2139095040
        %v1073 = vshrl.u32 %v1072, 23
        %v1074 = vsub.s32 %v1073, 127
        %v1075 = vand.u32 2147483647, %v1067
        %v1076 = vand.u32 %v1075, 8388607
        %v1077 = vor.u32 %v1076, 8388608
        %v1078 = vsub.s32 0, %v1077
        %v1079 = vadd.s32 %v1074, 1
        %vm1080 = vcmp.gt.s32.totalorder %v1079, 0
        %v1081 = vsel %vm1080, %v1079, 0
        %v1082 = vshrl.u32 %v1081, 5
        %v1083 = vand.u32 %v1081, 31
        %v1084 = vsub.s32 32, %v1083
        %v1085 = vshrl.u32 683565275, %v1084
        %v1086 = vshll.u32 683565275, %v1083
        %v1087 = vshrl.u32 2475754826, %v1084
        %v1088 = vor.u32 %v1086, %v1087
        %v1089 = vshll.u32 2475754826, %v1083
        %v1090 = vshrl.u32 2131351028, %v1084
        %v1091 = vor.u32 %v1089, %v1090
        %v1092 = vshll.u32 2131351028, %v1083
        %v1093 = vshrl.u32 2102212464, %v1084
        %v1094 = vor.u32 %v1092, %v1093
        %v1095 = vshll.u32 2102212464, %v1083
        %v1096 = vshrl.u32 920167782, %v1084
        %v1097 = vor.u32 %v1095, %v1096
        %v1098 = vshll.u32 920167782, %v1083
        %v1099 = vshrl.u32 1326507024, %v1084
        %v1100 = vor.u32 %v1098, %v1099
        %vm1101 = vcmp.lt.s32.totalorder %v1082, 1
        %vm1102 = vcmp.lt.s32.totalorder %v1082, 2
        %vm1103 = vcmp.lt.s32.totalorder %v1082, 3
        %vm1104 = vcmp.lt.s32.totalorder %v1082, 4
        %v1105 = vsel %vm1101, %v1085, %v1088
        %v1106 = vsel %vm1104, %v1094, 2102212464
        %v1107 = vsel %vm1103, %v1091, %v1106
        %v1108 = vsel %vm1102, %v1105, %v1107
        %v1109 = vsel %vm1101, %v1088, %v1091
        %v1110 = vsel %vm1104, %v1097, 920167782
        %v1111 = vsel %vm1103, %v1094, %v1110
        %v1112 = vsel %vm1102, %v1109, %v1111
        %v1113 = vsel %vm1101, %v1091, %v1094
        %v1114 = vsel %vm1104, %v1100, 1326507024
        %v1115 = vsel %vm1103, %v1097, %v1114
        %v1116 = vsel %vm1102, %v1113, %v1115
        %v1117 = vshll.u32 %v1077, 8
        %v1118 = vmul.u32.u64.compose %v1117, %v1116
        %v1119 = vextract.low.u32 %v1118
        %v1120 = vextract.high.u32 %v1118
        %v1121 = vmul.u32.u64.compose %v1117, %v1112
        %v1122 = vextract.low.u32 %v1121
        %v1123 = vextract.high.u32 %v1121
        %v1124 = vmul.u32 %v1117, %v1108
        %v1125 = vadd.s32 %v1120, %v1122
        %vm1126 = vc.u32 %v1120, %v1122
        %v1127 = vadd.s32 %v1123, 1
        %v1128 = vsel %vm1126, %v1127, %v1123
        %v1129 = vadd.s32 %v1124, %v1128
        %v1130 = vadd.s32 %v1129, 536870912
        %v1131 = vshrl.u32 %v1130, 30
        %v1132 = vshll.u32 %v1131, 30
        %v1133 = vsub.s32 %v1129, %v1132
        %vm1134 = vcmp.lt.s32.totalorder %v1133, 0
        %v1135 = vsub.s32 0, %v1133
        %v1136 = vsel %vm1134, %v1135, %v1133
        %v1137 = vclz %v1136
        %v1138 = vsub.s32 %v1137, 2
        %vm1139 = vcmp.gt.s32.totalorder 0, %v1138
        %v1140 = vsel %vm1139, 0, %v1138
        %v1141 = vsub.s32 32, %v1140
        %v1142 = vshll.u32 %v1133, %v1140
        %v1143 = vshrl.u32 %v1125, %v1141
        %v1144 = vor.u32 %v1142, %v1143
        %v1145 = vsub.s32 4294967266, %v1140
        %v1146 = vadd.s32 %v1145, 127
        %v1147 = vshll.u32 %v1146, 23
        %v1148 = vor.u32 4788187, %v1147
        %v1149 = vand.u32 2147483647, %v1148
        %v1151 = vcvt.s32.f32 %v1144
        %v1152 = vmul.f32 %v1151, %v1149
        %v1153 = vxor.u32 %v1152, 2147483648
        %v1154 = vsel %vm1071, %v1153, %v1152
        %v1155 = vsub.s32 4, %v1131
        %v1156 = vsel %vm1071, %v1155, %v1131
        %v1157 = vsel %vm1070, %v1067, %v1154
        %v1158 = vsel %vm1070, 0, %v1156
        %v1159 = vcosq.f32.pop %v1157
        %v1160 = vsinq.f32.pop %v1157
        %vm1161 = vweird.f32 %v1067
        %v1162 = vadd.s32 %v1158, 3
        %v1163 = vand.u32 %v1162, 3
        %vm1164 = vcmp.lt.s32.totalorder %v1163, 2
        %vm1165 = vcmp.eq.s32.totalorder %v1163, 0
        %v1166 = vxor.u32 %v1160, 2147483648
        %v1167 = vsel %vm1165, %v1159, %v1166
        %vm1168 = vcmp.eq.s32.totalorder %v1163, 2
        %v1169 = vxor.u32 %v1159, 2147483648
        %v1170 = vsel %vm1168, %v1169, %v1160
        %v1171 = vsel %vm1164, %v1167, %v1170
        %v1172 = vsel %vm1161, nan, %v1171
        %v1173 = vand.u32 2147483647, %v1068
        %vm1174 = vcmp.le.f32.partialorder %v1173, 0.7853982
        %vm1175 = vcmp.lt.s32.totalorder %v1068, 0
        %v1176 = vand.u32 %v1068, 2139095040
        %v1177 = vshrl.u32 %v1176, 23
        %v1178 = vsub.s32 %v1177, 127
        %v1179 = vand.u32 2147483647, %v1068
        %v1180 = vand.u32 %v1179, 8388607
        %v1181 = vor.u32 %v1180, 8388608
        %v1182 = vsub.s32 0, %v1181
        %v1183 = vadd.s32 %v1178, 1
        %vm1184 = vcmp.gt.s32.totalorder %v1183, 0
        %v1185 = vsel %vm1184, %v1183, 0
        %v1186 = vshrl.u32 %v1185, 5
        %v1187 = vand.u32 %v1185, 31
        %v1188 = vsub.s32 32, %v1187
        %v1189 = vshrl.u32 683565275, %v1188
        %v1190 = vshll.u32 683565275, %v1187
        %v1191 = vshrl.u32 2475754826, %v1188
        %v1192 = vor.u32 %v1190, %v1191
        %v1193 = vshll.u32 2475754826, %v1187
        %v1194 = vshrl.u32 2131351028, %v1188
        %v1195 = vor.u32 %v1193, %v1194
        %v1196 = vshll.u32 2131351028, %v1187
        %v1197 = vshrl.u32 2102212464, %v1188
        %v1198 = vor.u32 %v1196, %v1197
        %v1199 = vshll.u32 2102212464, %v1187
        %v1200 = vshrl.u32 920167782, %v1188
        %v1201 = vor.u32 %v1199, %v1200
        %v1202 = vshll.u32 920167782, %v1187
        %v1203 = vshrl.u32 1326507024, %v1188
        %v1204 = vor.u32 %v1202, %v1203
        %vm1205 = vcmp.lt.s32.totalorder %v1186, 1
        %vm1206 = vcmp.lt.s32.totalorder %v1186, 2
        %vm1207 = vcmp.lt.s32.totalorder %v1186, 3
        %vm1208 = vcmp.lt.s32.totalorder %v1186, 4
        %v1209 = vsel %vm1205, %v1189, %v1192
        %v1210 = vsel %vm1208, %v1198, 2102212464
        %v1211 = vsel %vm1207, %v1195, %v1210
        %v1212 = vsel %vm1206, %v1209, %v1211
        %v1213 = vsel %vm1205, %v1192, %v1195
        %v1214 = vsel %vm1208, %v1201, 920167782
        %v1215 = vsel %vm1207, %v1198, %v1214
        %v1216 = vsel %vm1206, %v1213, %v1215
        %v1217 = vsel %vm1205, %v1195, %v1198
        %v1218 = vsel %vm1208, %v1204, 1326507024
        %v1219 = vsel %vm1207, %v1201, %v1218
        %v1220 = vsel %vm1206, %v1217, %v1219
        %v1221 = vshll.u32 %v1181, 8
        %v1222 = vmul.u32.u64.compose %v1221, %v1220
        %v1223 = vextract.low.u32 %v1222
        %v1224 = vextract.high.u32 %v1222
        %v1225 = vmul.u32.u64.compose %v1221, %v1216
        %v1226 = vextract.low.u32 %v1225
        %v1227 = vextract.high.u32 %v1225
        %v1228 = vmul.u32 %v1221, %v1212
        %v1229 = vadd.s32 %v1224, %v1226
        %vm1230 = vc.u32 %v1224, %v1226
        %v1231 = vadd.s32 %v1227, 1
        %v1232 = vsel %vm1230, %v1231, %v1227
        %v1233 = vadd.s32 %v1228, %v1232
        %v1234 = vadd.s32 %v1233, 536870912
        %v1235 = vshrl.u32 %v1234, 30
        %v1236 = vshll.u32 %v1235, 30
        %v1237 = vsub.s32 %v1233, %v1236
        %vm1238 = vcmp.lt.s32.totalorder %v1237, 0
        %v1239 = vsub.s32 0, %v1237
        %v1240 = vsel %vm1238, %v1239, %v1237
        %v1241 = vclz %v1240
        %v1242 = vsub.s32 %v1241, 2
        %vm1243 = vcmp.gt.s32.totalorder 0, %v1242
        %v1244 = vsel %vm1243, 0, %v1242
        %v1245 = vsub.s32 32, %v1244
        %v1246 = vshll.u32 %v1237, %v1244
        %v1247 = vshrl.u32 %v1229, %v1245
        %v1248 = vor.u32 %v1246, %v1247
        %v1249 = vsub.s32 4294967266, %v1244
        %v1250 = vadd.s32 %v1249, 127
        %v1251 = vshll.u32 %v1250, 23
        %v1252 = vor.u32 4788187, %v1251
        %v1253 = vand.u32 2147483647, %v1252
        %v1255 = vcvt.s32.f32 %v1248
        %v1256 = vmul.f32 %v1255, %v1253
        %v1257 = vxor.u32 %v1256, 2147483648
        %v1258 = vsel %vm1175, %v1257, %v1256
        %v1259 = vsub.s32 4, %v1235
        %v1260 = vsel %vm1175, %v1259, %v1235
        %v1261 = vsel %vm1174, %v1068, %v1258
        %v1262 = vsel %vm1174, 0, %v1260
        %v1263 = vcosq.f32.pop %v1261
        %v1264 = vsinq.f32.pop %v1261
        %vm1265 = vweird.f32 %v1068
        %v1266 = vadd.s32 %v1262, 3
        %v1267 = vand.u32 %v1266, 3
        %vm1268 = vcmp.lt.s32.totalorder %v1267, 2
        %vm1269 = vcmp.eq.s32.totalorder %v1267, 0
        %v1270 = vxor.u32 %v1264, 2147483648
        %v1271 = vsel %vm1269, %v1263, %v1270
        %vm1272 = vcmp.eq.s32.totalorder %v1267, 2
        %v1273 = vxor.u32 %v1263, 2147483648
        %v1274 = vsel %vm1272, %v1273, %v1264
        %v1275 = vsel %vm1268, %v1271, %v1274
        %v1276 = vsel %vm1265, nan, %v1275
        %v1277 = vmul.f32 %v1172, %v1172
        %v1278 = vmul.f32 %v1276, %v1276
        %1280 = vset.pattern.permute.xlu0 0
        %1281 = vperm.xlu0 %1280, %v1054
        %v1282 = vpop.permute.xlu0 %1281
        %1285 = vset.pattern.permute.xlu0 0
        %1286 = vperm.xlu0 %1285, %v1056
        %v1287 = vpop.permute.xlu0 %1286
        %v1289 = vmul.f32 %v1282, %v1277
        %v1290 = vmul.f32 %v1287, %v1278
        %v1291 = vadd.f32 %v1041, %v1289
        %v1292 = vadd.f32 %v1046, %v1290
        %v1293 = vld [vmem:[%s6] sm:$0xff]
        %v1294 = vld [vmem:[%s6 + $0x8] sm:$0xff]
        %v1295 = vld [vmem:[%s7] sm:$0xff]
        %v1296 = vld [vmem:[%s7 + $0x8] sm:$0xff]
        %1298 = vset.pattern.permute.xlu0 0
        %1299 = vperm.xlu0 %1298, %v1295
        %v1300 = vpop.permute.xlu0 %1299
        %1303 = vset.pattern.permute.xlu0 0
        %1304 = vperm.xlu0 %1303, %v1296
        %v1305 = vpop.permute.xlu0 %1304
        %vm1307 = vcmask 130048
        %v1309 = vsel %vm1307, %v1293, 0
        %v1312 = vsel %vm1307, %v1294, 0
        %1314 = vmatprep.subr.mxu0 0.0
        %1315 = vmatpush1.msra.mxu0 %v1291
        %1316 = vmatprep.subr.mxu0 0.0
        %1317 = vmatpush1.msra.mxu0 %v1292
        %1318 = vmatprep.subr.mxu0 0.0
        %1319 = vmatpush1.msra.mxu0 0.0
        %1320 = vmatprep.subr.mxu0 0.0
        %1321 = vmatpush1.msra.mxu0 0.0
        %1322 = vmatprep.subr.mxu0 0.0
        %1323 = vmatpush1.msra.mxu0 0.0
        %1324 = vmatprep.subr.mxu0 0.0
        %1325 = vmatpush1.msra.mxu0 0.0
        %1326 = vmatprep.subr.mxu0 0.0
        %1327 = vmatpush1.msra.mxu0 0.0
        %1328 = vmatprep.subr.mxu0 0.0
        %1329 = vmatpush1.msra.mxu0 0.0
        %1330 = vmatprep.subr.mxu0 0.0
        %1331 = vmatpush1.msra.mxu0 0.0
        %1332 = vmatprep.subr.mxu0 0.0
        %1333 = vmatpush1.msra.mxu0 0.0
        %1334 = vmatprep.subr.mxu0 0.0
        %1335 = vmatpush1.msra.mxu0 0.0
        %1336 = vmatprep.subr.mxu0 0.0
        %1337 = vmatpush1.msra.mxu0 0.0
        %1338 = vmatprep.subr.mxu0 0.0
        %1339 = vmatpush1.msra.mxu0 0.0
        %1340 = vmatprep.subr.mxu0 0.0
        %1341 = vmatpush1.msra.mxu0 0.0
        %1342 = vmatprep.subr.mxu0 0.0
        %1343 = vmatpush1.msra.mxu0 0.0
        %1344 = vmatprep.subr.mxu0 0.0
        %1345 = vmatpush1.msra.mxu0 0.0
        %1346 = vmatprep.subr.mxu0 0.0
        %1347 = vmatpush1.msra.mxu0 0.0
        %1348 = vmatprep.subr.mxu0 0.0
        %1349 = vmatpush1.msra.mxu0 0.0
        %1350 = vmatprep.subr.mxu0 0.0
        %1351 = vmatpush1.msra.mxu0 0.0
        %1352 = vmatprep.subr.mxu0 0.0
        %1353 = vmatpush1.msra.mxu0 0.0
        %1354 = vmatprep.subr.mxu0 0.0
        %1355 = vmatpush1.msra.mxu0 0.0
        %1356 = vmatprep.subr.mxu0 0.0
        %1357 = vmatpush1.msra.mxu0 0.0
        %1358 = vmatprep.subr.mxu0 0.0
        %1359 = vmatpush1.msra.mxu0 0.0
        %1360 = vmatprep.subr.mxu0 0.0
        %1361 = vmatpush1.msra.mxu0 0.0
        %1362 = vmatprep.subr.mxu0 0.0
        %1363 = vmatpush1.msra.mxu0 0.0
        %1364 = vmatprep.subr.mxu0 0.0
        %1365 = vmatpush1.msra.mxu0 0.0
        %1366 = vmatprep.subr.mxu0 0.0
        %1367 = vmatpush1.msra.mxu0 0.0
        %1368 = vmatprep.subr.mxu0 0.0
        %1369 = vmatpush1.msra.mxu0 0.0
        %1370 = vmatprep.subr.mxu0 0.0
        %1371 = vmatpush1.msra.mxu0 0.0
        %1372 = vmatprep.subr.mxu0 0.0
        %1373 = vmatpush1.msra.mxu0 0.0
        %1374 = vmatprep.subr.mxu0 0.0
        %1375 = vmatpush1.msra.mxu0 0.0
        %1376 = vmatprep.subr.mxu0 0.0
        %1377 = vmatpush1.msra.mxu0 0.0
        %1378 = vmatprep.mubr.f32.mxu0 0.0
        %1379 = vmatmul.mubr.f32.gmra.mrb[0].mxu0 %v1309
        %v1380 = vpop.f32.mrb[0].mxu0
        %v1381 = vadd.f32 %v1300, %v1380
        %v1382 = vpop.f32.mrb[0].mxu0
        %1383 = vmatprep.mubr.f32.mxu0 0.0
        %1384 = vmatmul.mubr.f32.gmra.mrb[0].mxu0 %v1312
        %v1385 = vpop.f32.mrb[0].mxu0
        %v1386 = vadd.f32 %v1305, %v1385
        %v1387 = vpop.f32.mrb[0].mxu0
        %1388 = vdwg.mxu0
        %v1389 = vadd.f32 %v394, %v1381
        %v1390 = vadd.f32 %v395, %v1386
        %1391 = vst [vmem:[%s384] sm:$0xff] %v1389
        %1392 = vst [vmem:[%s384 + $0x8] sm:$0xff] %v1390
        %s1393 = sand.u32 %s226, 1
        %s1394 = scalar_lea.sflag [#allocation4], %s1393
        %s1395 = sand.u32 %s226, 1
        %s1396 = smul.addr %s1395, 16
        %s1397 = scalar_lea.vmem [#allocation3], %s1396
        // Predicated region
        $region91: #{residual_unit.1} parent=85 // pred_check
          %p1398 = pneg %p236
        $region92: #{residual_unit.1} parent=85 // pred_check_branch
          %1400 = sbr.rel (%p1398) target = $region94
        $region93: #{residual_unit.1} parent=85 // pred_region
          %s1402 = ssub.s32 256, 256
          %1403 = vsyncadd %s1394, %s1402
          %s1404 = smul.addr %s26, 4
          %s1405 = sadd.s32 %s27, %s1404
          %s1406 = smul.addr %s1405, 128
          %s1407 = scalar_lea.hbm %s8, %s1406
          %s1408 = sshll.u32 %s1397, 4
          %s1409 = int_to_ptr.vmem [resolvable:$true] %s1408
          %1414 = dma.vmem_to_hbm [thread:$0]  %s1409, 256, %s1407, %s1394, 128, 256, 8
        $region94: #{residual_unit.1} parent=85 // pred_fallthru
          _
      $region86: #{residual_unit.1} parent=5 // pred_fallthru
        _
      %p1415 = scmp.le.s32.totalorder 2, %s17
      // Predicated region
      $region95: #{residual_unit.1} parent=5 // pred_check
        %p1416 = pneg %p1415
      $region96: #{residual_unit.1} parent=5 // pred_check_branch
        %1418 = sbr.rel (%p1416) target = $region98
      $region97: #{residual_unit.1} parent=5 // pred_region
        %s1419 = ssub.s32 %s17, 2
        // Predicated region
        $region99: #{residual_unit.1} parent=97 // pred_check
          %p1420 = pneg %p242
        $region100: #{residual_unit.1} parent=97 // pred_check_branch
          %1422 = sbr.rel (%p1420) target = $region102
        $region101: #{residual_unit.1} parent=97 // pred_region
          %s1423 = sand.u32 %s227, 1
          %s1424 = scalar_lea.sflag [#allocation4], %s1423
          %s1425 = sand.u32 %s227, 1
          %s1426 = smul.addr %s1425, 16
          %s1427 = scalar_lea.vmem [#allocation3], %s1426
          %1428 = dma.done %s1424, 256
        $region102: #{residual_unit.1} parent=97 // pred_fallthru
          _
      $region98: #{residual_unit.1} parent=5 // pred_fallthru
        _
    $region6: #{residual_unit.1} parent=1 // loop_footer
      %s21 = sadd.s32 1, %s17
    $region7: #{residual_unit.1} parent=1 // loop_footer_branch
      %16 = sbr.rel target = $region3
    $region8: #{residual_unit.1} parent=1 // loop_exit
      _
    %1429 = vsyncpa [#allocation4], 1
    %s1430 = scalar_lea.sflag [#allocation4], 1
    %1431 = vsyncpa %s1430, 1

</llo_original>
